<compile_context>
chip_gen: v6e
topology: v6e:2x2x1
jax: 0.10.0
libtpu: 0.0.40
codegen_flags: <defaults>
</compile_context>

<pallas_src>
import jax
import jax.numpy as jnp
import numpy as np
from jax import lax
from jax.experimental import pallas as pl
from jax.experimental.pallas import tpu as pltpu


# ----------------------------------------------------------------------------
# Parameter construction (deterministic, mirrors the PyTorch module's shapes).
# ----------------------------------------------------------------------------
def init_block_params(key, cin, cout, end_with_pooling):
    ks = jax.random.split(key, 18)
    n = lambda k, s: (0.1 * jax.random.normal(k, s)).astype(jnp.float32)
    p = {
        "pw1_w": n(ks[0], (cout, cin, 1, 1)), "pw1_b": n(ks[1], (cout,)),
        "dw1_w": n(ks[2], (cout, 1, 3, 3)),   "dw1_b": n(ks[3], (cout,)),
        "bn1_gamma": 1.0 + n(ks[4], (cout,)), "bn1_beta": n(ks[5], (cout,)),
        "bn1_mean": n(ks[6], (cout,)),
        "bn1_var": 0.5 + jnp.abs(n(ks[7], (cout,))),
        "pw2_w": n(ks[8], (cout, cout, 1, 1)), "pw2_b": n(ks[9], (cout,)),
        "dw2_w": n(ks[10], (cout, 1, 3, 3)),   "dw2_b": n(ks[11], (cout,)),
        "bn2_gamma": 1.0 + n(ks[12], (cout,)), "bn2_beta": n(ks[13], (cout,)),
        "bn2_mean": n(ks[14], (cout,)),
        "bn2_var": 0.5 + jnp.abs(n(ks[15], (cout,))),
    }
    if end_with_pooling:
        p["skip_w"] = n(ks[16], (cout, cin, 1, 1))
        p["skip_b"] = n(ks[17], (cout,))
    return p


def _chip_vmem_bytes():
    """Per-core VMEM capacity, conservative fallback = v7x's 64 MiB / TC."""
    try:
        return int(pltpu.get_tpu_info().vmem_capacity_bytes)
    except Exception:
        return 64 << 20


# ----------------------------------------------------------------------------
# Pallas implementation.
# ----------------------------------------------------------------------------
def block_forward(x_nchw, p, *, start_with_relu, end_with_pooling,
                  vmem_budget_bytes=None):
    """Pallas forward of Block.  x_nchw: (N, Cin, H, W) float32 -> NCHW out."""
    N, Cin, H, W = map(int, x_nchw.shape)
    Cout = int(p["pw1_w"].shape[0])
    eps = 1e-5

    if end_with_pooling:
        Ho, Wo = (H - 1) // 2 + 1, (W - 1) // 2 + 1
    else:
        assert Cin == Cout, "Identity skip requires in_channels == out_channels"
        Ho, Wo = H, W
    Lin, L, Lo = W * Cin, W * Cout, Wo * Cout

    # ---- batch block (Nb) / VMEM limit, clamped to the actual chip ----------
    chip_vmem = _chip_vmem_bytes()
    budget = chip_vmem // 2 if vmem_budget_bytes is None else vmem_budget_bytes
    budget = min(budget, int(0.75 * chip_vmem))
    # i/o blocks + pool scratch + (generous) bound on live f32 slabs + corr maps
    bytes_per_image = 4 * (H * Lin + Ho * Lo + 16 * H * L)
    weight_bytes = 4 * (Lin * L + L * L + 2 * 9 * L
                        + ((Lin * Lo + Lo + L * Lo) if end_with_pooling else 0))

    def fits(d):
        return 2 * d * bytes_per_image + 2 * weight_bytes <= budget

    divisors = [d for d in range(1, N + 1) if N % d == 0]
    fitting = [d for d in divisors if fits(d)] or [1]
    # Prefer an even number of grid steps (v7x: 2 TensorCores share the
    # "parallel" batch axis); otherwise the largest block that fits.
    even = [d for d in fitting if (N // d) >= 2 and (N // d) % 2 == 0]
    nb = max(even) if even else max(fitting)
    grid = (N // nb,)
    R, Rd = nb * H, nb * Ho

    vmem_limit = int(min(chip_vmem - (4 << 20),
                         max(32 << 20,
                             2 * nb * bytes_per_image + 2 * weight_bytes)))
    vmem_limit = max(vmem_limit, 16 << 20)

    # ---- wrapper-side constant folding (zero runtime cost) ------------------
    # BN (eval) scale -> depthwise taps; pointwise bias + depthwise bias + BN
    # bias -> one exact, border-aware correction map per separable conv.
    def fold(dw_w, dw_b, gamma, beta, mean, var, pw_b):
        s = gamma / jnp.sqrt(var + eps)                                      # (C,)
        taps = jnp.transpose(dw_w[:, 0], (1, 2, 0)).reshape(9, Cout) * s[None, :]
        bias = dw_b * s + beta - mean * s                                    # (C,)
        ones = jnp.pad(jnp.ones((H, W, 1), jnp.float32), ((1, 1), (1, 1), (0, 0)))
        vts = jnp.zeros((H, W, Cout), jnp.float32)   # sum of valid taps at (h,w,c)
        for kh in range(3):
            for kw in range(3):
                vts = vts + (ones[kh:kh + H, kw:kw + W, :]
                             * taps[kh * 3 + kw][None, None, :])
        corr = (pw_b[None, None, :] * vts + bias[None, None, :]).reshape(H, L)
        corr = jnp.tile(corr, (nb, 1))               # (nb*H, L)
        taps_vec = jnp.tile(taps, (1, W))            # (9, L): index = w*Cout + c
        return taps_vec.astype(jnp.float32), corr.astype(jnp.float32)

    t1, c1 = fold(p["dw1_w"], p["dw1_b"], p["bn1_gamma"], p["bn1_beta"],
                  p["bn1_mean"], p["bn1_var"], p["pw1_b"])
    t2, c2 = fold(p["dw2_w"], p["dw2_b"], p["bn2_gamma"], p["bn2_beta"],
                  p["bn2_mean"], p["bn2_var"], p["pw2_b"])

    # 1x1 convs as lane-dense block-diagonal matmuls (W*Cin x W*Cout).
    eyeW = jnp.eye(W, dtype=jnp.float32)
    pw1 = p["pw1_w"][:, :, 0, 0].T.astype(jnp.float32)          # (Cin, Cout)
    pw2 = p["pw2_w"][:, :, 0, 0].T.astype(jnp.float32)          # (Cout, Cout)
    w1 = jnp.einsum("wv,ic->wivc", eyeW, pw1).reshape(Lin, L)
    w2 = jnp.einsum("wv,ic->wivc", eyeW, pw2).reshape(L, L)

    # NCHW -> lane-dense (N, H, W*Cin)
    x = jnp.transpose(x_nchw, (0, 2, 3, 1)).astype(jnp.float32).reshape(N, H, Lin)

    inputs = [x, w1, t1, c1, w2, t2, c2]
    if end_with_pooling:
        # Stride-2 W selection folded into the skip weight and the pool's 0/1
        # decimation matrix (both built once here).
        esel = (jnp.arange(W)[:, None] == 2 * jnp.arange(Wo)[None, :]
                ).astype(jnp.float32)                           # (W, Wo)
        skw = p["skip_w"][:, :, 0, 0].T.astype(jnp.float32)     # (Cin, Cout)
        wsk = jnp.einsum("wv,ic->wivc", esel, skw).reshape(Lin, Lo)
        sdec = jnp.einsum("wv,cd->wcvd", esel,
                          jnp.eye(Cout, dtype=jnp.float32)).reshape(L, Lo)
        skb = jnp.tile(p["skip_b"].astype(jnp.float32), Wo).reshape(1, Lo)
        inputs += [wsk, skb, sdec]

    def const_spec(a):
        return pl.BlockSpec(tuple(a.shape), lambda n: (0,) * a.ndim)

    in_specs = [pl.BlockSpec((nb, H, Lin), lambda n: (n, 0, 0))]
    in_specs += [const_spec(a) for a in inputs[1:]]
    out_specs = pl.BlockSpec((nb, Ho, Lo), lambda n: (n, 0, 0))
    scratch = [pltpu.VMEM((nb, H, L), jnp.float32)] if end_with_pooling else []

    neg_inf = float("-inf")

    def kernel(*refs):
        if end_with_pooling:
            (x_ref, w1_ref, t1_ref, c1_ref, w2_ref, t2_ref, c2_ref,
             wsk_ref, skb_ref, sdec_ref, out_ref, scr_ref) = refs
        else:
            (x_ref, w1_ref, t1_ref, c1_ref, w2_ref, t2_ref, c2_ref,
             out_ref) = refs

        # lane index (= w*Cout + c) and within-image row index, for masks.
        lane = lax.broadcasted_iota(jnp.int32, (R, L), 1)
        hrow = lax.broadcasted_iota(jnp.int32, (nb, H, L), 1).reshape(R, L)

        def shift_w(v, fill, left):
            # left=True : out[h, w] = v[h, w-1]  (fill where w == 0)
            # left=False: out[h, w] = v[h, w+1]  (fill where w == W-1)
            if left:
                return jnp.where(lane >= Cout, pltpu.roll(v, Cout, axis=1), fill)
            return jnp.where(lane < L - Cout,
                             pltpu.roll(v, L - Cout, axis=1), fill)

        def shift_h(v, fill, up):
            # up=True : out[h] = v[h-1] (fill at h == 0); image-boundary safe.
            if up:
                return jnp.where(hrow >= 1, pltpu.roll(v, 1, axis=0), fill)
            return jnp.where(hrow < H - 1, pltpu.roll(v, R - 1, axis=0), fill)

        def sep_conv(v, w_ref, t_ref, c_ref):
            # Pointwise 1x1 (block-diag matmul; bias folded into c_ref).
            y = jnp.dot(v, w_ref[...], preferred_element_type=jnp.float32)  # (R,L)
            t = t_ref[...]                                                   # (9,L)
            ym = shift_w(y, 0.0, True)
            yp = shift_w(y, 0.0, False)
            # Depthwise 3x3, stride 1, pad 1 — entirely in registers.
            r0 = ym * t[0:1] + y * t[1:2] + yp * t[2:3]
            r1 = ym * t[3:4] + y * t[4:5] + yp * t[5:6]
            r2 = ym * t[6:7] + y * t[7:8] + yp * t[8:9]
            return (r1 + shift_h(r0, 0.0, True) + shift_h(r2, 0.0, False)
                    + c_ref[...])

        xin = x_ref[...].reshape(R, Lin)
        h0 = jnp.maximum(xin, 0.0) if start_with_relu else xin
        z1 = jnp.maximum(sep_conv(h0, w1_ref, t1_ref, c1_ref), 0.0)  # conv1+BN1+ReLU
        z2 = sep_conv(z1, w2_ref, t2_ref, c2_ref)                    # conv2+BN2

        if end_with_pooling:
            # MaxPool(3, stride 2, pad 1): full-res 3x3 max in registers ...
            zm = shift_w(z2, neg_inf, True)
            zp = shift_w(z2, neg_inf, False)
            w3 = jnp.maximum(jnp.maximum(zm, z2), zp)
            hu = shift_h(w3, neg_inf, True)
            hd = shift_h(w3, neg_inf, False)
            scr_ref[...] = jnp.maximum(jnp.maximum(hu, w3), hd).reshape(nb, H, L)
            # ... then one H-strided read + one 0/1 selection matmul (W decim.).
            ev = scr_ref[:, pl.ds(0, Ho, stride=2), :].reshape(Rd, L)
            pooled = jnp.dot(ev, sdec_ref[...],
                             preferred_element_type=jnp.float32)

            # Skip: 1x1 conv stride 2.  Even rows of x (cheap H-stride read);
            # the W decimation is folded into the skip weight matrix.
            xe = x_ref[:, pl.ds(0, Ho, stride=2), :].reshape(Rd, Lin)
            skip = (jnp.dot(xe, wsk_ref[...],
                            preferred_element_type=jnp.float32) + skb_ref[...])
            out_ref[...] = (pooled + skip).reshape(nb, Ho, Lo)
        else:
            out_ref[...] = (z2 + xin).reshape(nb, H, L)   # Identity skip

    out = pl.pallas_call(
        kernel,
        out_shape=jax.ShapeDtypeStruct((N, Ho, Lo), jnp.float32),
        grid_spec=pltpu.PrefetchScalarGridSpec(
            num_scalar_prefetch=0,
            grid=grid,
            in_specs=in_specs,
            out_specs=out_specs,
            scratch_shapes=scratch,
        ),
        compiler_params=pltpu.CompilerParams(
            dimension_semantics=("parallel",),     # batch steps are independent
            vmem_limit_bytes=vmem_limit,
        ),
    )(*inputs)

    return jnp.transpose(out.reshape(N, Ho, Wo, Cout), (0, 3, 1, 2))   # NCHW


# ----------------------------------------------------------------------------
# Pure-JAX reference (NCHW, mirrors the PyTorch module, eval-mode BN).
# ----------------------------------------------------------------------------
def ref_block(x, p, *, start_with_relu, end_with_pooling):
    eps = 1e-5

    def conv(h, w, b, stride, pad, groups=1):
        out = lax.conv_general_dilated(
            h, w, (stride, stride), pad,
            dimension_numbers=("NCHW", "OIHW", "NCHW"),
            feature_group_count=groups)
        return out + b[None, :, None, None]

    def bn(h, g, beta, mean, var):
        return ((h - mean[None, :, None, None])
                / jnp.sqrt(var[None, :, None, None] + eps)
                * g[None, :, None, None] + beta[None, :, None, None])

    cout = p["pw1_w"].shape[0]
    h = jnp.maximum(x, 0.0) if start_with_relu else x
    h = conv(h, p["pw1_w"], p["pw1_b"], 1, [(0, 0), (0, 0)])
    h = conv(h, p["dw1_w"], p["dw1_b"], 1, [(1, 1), (1, 1)], groups=cout)
    h = bn(h, p["bn1_gamma"], p["bn1_beta"], p["bn1_mean"], p["bn1_var"])
    h = jnp.maximum(h, 0.0)
    h = conv(h, p["pw2_w"], p["pw2_b"], 1, [(0, 0), (0, 0)])
    h = conv(h, p["dw2_w"], p["dw2_b"], 1, [(1, 1), (1, 1)], groups=cout)
    h = bn(h, p["bn2_gamma"], p["bn2_beta"], p["bn2_mean"], p["bn2_var"])
    if end_with_pooling:
        h = lax.reduce_window(h, -jnp.inf, lax.max,
                              (1, 1, 3, 3), (1, 1, 2, 2),
                              ((0, 0), (0, 0), (1, 1), (1, 1)))
        skip = conv(x, p["skip_w"], p["skip_b"], 2, [(0, 0), (0, 0)])
        return skip + h
    return x + h


# ----------------------------------------------------------------------------
if __name__ == "__main__":
    key = jax.random.PRNGKey(0)
    kx1, kp1, kx2, kp2 = jax.random.split(key, 4)

    # Config 1: start_with_relu=True, end_with_pooling=True (strided skip conv)
    N, Cin, Cout, H, W = 2, 4, 8, 16, 16
    x1 = jax.random.normal(kx1, (N, Cin, H, W), jnp.float32)
    p1 = init_block_params(kp1, Cin, Cout, end_with_pooling=True)
    out1 = block_forward(x1, p1, start_with_relu=True, end_with_pooling=True)
    ref1 = ref_block(x1, p1, start_with_relu=True, end_with_pooling=True)

    # Config 2: start_with_relu=False, end_with_pooling=False (Identity skip)
    x2 = jax.random.normal(kx2, (N, Cout, H, W), jnp.float32)
    p2 = init_block_params(kp2, Cout, Cout, end_with_pooling=False)
    out2 = block_forward(x2, p2, start_with_relu=False, end_with_pooling=False)
    ref2 = ref_block(x2, p2, start_with_relu=False, end_with_pooling=False)

    out1, out2, ref1, ref2 = jax.block_until_ready((out1, out2, ref1, ref2))

    assert out1.shape == (N, Cout, H // 2, W // 2), out1.shape
    assert out2.shape == (N, Cout, H, W), out2.shape
    np.testing.assert_allclose(np.asarray(out1), np.asarray(ref1),
                               rtol=2e-2, atol=2e-2)
    np.testing.assert_allclose(np.asarray(out2), np.asarray(ref2),
                               rtol=2e-2, atol=2e-2)
    print("KERNEL_OK")
</pallas_src>

<mosaic_0001>
module attributes {stable_mosaic.version = 11 : i64} {
  func.func @kernel(%arg0: i32, %arg1: memref<1x16x64xf32, #tpu.memory_space<vmem>>, %arg2: memref<64x128xf32, #tpu.memory_space<vmem>>, %arg3: memref<9x128xf32, #tpu.memory_space<vmem>>, %arg4: memref<16x128xf32, #tpu.memory_space<vmem>>, %arg5: memref<128x128xf32, #tpu.memory_space<vmem>>, %arg6: memref<9x128xf32, #tpu.memory_space<vmem>>, %arg7: memref<16x128xf32, #tpu.memory_space<vmem>>, %arg8: memref<64x64xf32, #tpu.memory_space<vmem>>, %arg9: memref<1x64xf32, #tpu.memory_space<vmem>>, %arg10: memref<128x64xf32, #tpu.memory_space<vmem>>, %arg11: memref<1x8x64xf32, #tpu.memory_space<vmem>>, %arg12: memref<1x16x128xf32, #tpu.memory_space<vmem>>) attributes {dimension_semantics = [#tpu.dimension_semantics<parallel>], iteration_bounds = array<i64: 2>, scalar_prefetch = 0 : i64, scratch_operands = 1 : i64, tpu.core_type = #tpu.core_type<tc>, window_params = [{transform_indices = @transform_0, window_bounds = array<i64: 1, 16, 64>}, {pipeline_mode = #tpu.pipeline_mode<synchronous>, transform_indices = @transform_1, window_bounds = array<i64: 64, 128>}, {pipeline_mode = #tpu.pipeline_mode<synchronous>, transform_indices = @transform_2, window_bounds = array<i64: 9, 128>}, {pipeline_mode = #tpu.pipeline_mode<synchronous>, transform_indices = @transform_3, window_bounds = array<i64: 16, 128>}, {pipeline_mode = #tpu.pipeline_mode<synchronous>, transform_indices = @transform_4, window_bounds = array<i64: 128, 128>}, {pipeline_mode = #tpu.pipeline_mode<synchronous>, transform_indices = @transform_5, window_bounds = array<i64: 9, 128>}, {pipeline_mode = #tpu.pipeline_mode<synchronous>, transform_indices = @transform_6, window_bounds = array<i64: 16, 128>}, {pipeline_mode = #tpu.pipeline_mode<synchronous>, transform_indices = @transform_7, window_bounds = array<i64: 64, 64>}, {pipeline_mode = #tpu.pipeline_mode<synchronous>, transform_indices = @transform_8, window_bounds = array<i64: 1, 64>}, {pipeline_mode = #tpu.pipeline_mode<synchronous>, transform_indices = @transform_9, window_bounds = array<i64: 128, 64>}, {transform_indices = @transform_10, window_bounds = array<i64: 1, 8, 64>}]} {
    %0 = tpu.iota {dimensions = array<i32: 1>} : vector<16x128xi32>
    %1 = tpu.iota {dimensions = array<i32: 1>} : vector<1x16x128xi32>
    %2 = vector.shape_cast %1 : vector<1x16x128xi32> to vector<16x128xi32>
    %c0 = arith.constant 0 : index
    %c0_0 = arith.constant 0 : index
    %c0_1 = arith.constant 0 : index
    %3 = vector.load %arg1[%c0, %c0_0, %c0_1] : memref<1x16x64xf32, #tpu.memory_space<vmem>>, vector<1x16x64xf32>
    %4 = vector.shape_cast %3 : vector<1x16x64xf32> to vector<16x64xf32>
    %cst = arith.constant 0.000000e+00 : f32
    %5 = vector.broadcast %cst : f32 to vector<16x64xf32>
    %6 = arith.maximumf %4, %5 : vector<16x64xf32>
    %c0_2 = arith.constant 0 : index
    %c0_3 = arith.constant 0 : index
    %7 = vector.load %arg2[%c0_2, %c0_3] : memref<64x128xf32, #tpu.memory_space<vmem>>, vector<64x128xf32>
    %cst_4 = arith.constant dense<0.000000e+00> : vector<16x128xf32>
    %8 = tpu.matmul %6, %7, %cst_4 {dimension_numbers = #tpu.dot_dimension_numbers<[1], [0], [0], [1], [0, 0, 1, 1], [], []>} : vector<16x64xf32>, vector<64x128xf32>, vector<16x128xf32> -> vector<16x128xf32>
    %c0_5 = arith.constant 0 : index
    %c0_6 = arith.constant 0 : index
    %9 = vector.load %arg3[%c0_5, %c0_6] : memref<9x128xf32, #tpu.memory_space<vmem>>, vector<9x128xf32>
    %c8_i32 = arith.constant 8 : i32
    %10 = vector.broadcast %c8_i32 : i32 to vector<16x128xi32>
    %11 = arith.cmpi sge, %0, %10 : vector<16x128xi32>
    %c8_i32_7 = arith.constant 8 : i32
    %12 = tpu.dynamic_rotate %8 by %c8_i32_7 dim 1 : vector<16x128xf32>, i32 -> vector<16x128xf32>
    %cst_8 = arith.constant 0.000000e+00 : f32
    %13 = vector.broadcast %cst_8 : f32 to vector<16x128xf32>
    %14 = arith.select %11, %12, %13 : vector<16x128xi1>, vector<16x128xf32>
    %c120_i32 = arith.constant 120 : i32
    %15 = vector.broadcast %c120_i32 : i32 to vector<16x128xi32>
    %16 = arith.cmpi slt, %0, %15 : vector<16x128xi32>
    %c120_i32_9 = arith.constant 120 : i32
    %17 = tpu.dynamic_rotate %8 by %c120_i32_9 dim 1 : vector<16x128xf32>, i32 -> vector<16x128xf32>
    %cst_10 = arith.constant 0.000000e+00 : f32
    %18 = vector.broadcast %cst_10 : f32 to vector<16x128xf32>
    %19 = arith.select %16, %17, %18 : vector<16x128xi1>, vector<16x128xf32>
    %20 = vector.extract_strided_slice %9 {offsets = [0, 0], sizes = [1, 128], strides = [1, 1]} : vector<9x128xf32> to vector<1x128xf32>
    %21 = vector.broadcast %20 : vector<1x128xf32> to vector<16x128xf32>
    %22 = arith.mulf %14, %21 : vector<16x128xf32>
    %23 = vector.extract_strided_slice %9 {offsets = [1, 0], sizes = [1, 128], strides = [1, 1]} : vector<9x128xf32> to vector<1x128xf32>
    %24 = vector.broadcast %23 : vector<1x128xf32> to vector<16x128xf32>
    %25 = arith.mulf %8, %24 : vector<16x128xf32>
    %26 = arith.addf %22, %25 : vector<16x128xf32>
    %27 = vector.extract_strided_slice %9 {offsets = [2, 0], sizes = [1, 128], strides = [1, 1]} : vector<9x128xf32> to vector<1x128xf32>
    %28 = vector.broadcast %27 : vector<1x128xf32> to vector<16x128xf32>
    %29 = arith.mulf %19, %28 : vector<16x128xf32>
    %30 = arith.addf %26, %29 : vector<16x128xf32>
    %31 = vector.extract_strided_slice %9 {offsets = [3, 0], sizes = [1, 128], strides = [1, 1]} : vector<9x128xf32> to vector<1x128xf32>
    %32 = vector.broadcast %31 : vector<1x128xf32> to vector<16x128xf32>
    %33 = arith.mulf %14, %32 : vector<16x128xf32>
    %34 = vector.extract_strided_slice %9 {offsets = [4, 0], sizes = [1, 128], strides = [1, 1]} : vector<9x128xf32> to vector<1x128xf32>
    %35 = vector.broadcast %34 : vector<1x128xf32> to vector<16x128xf32>
    %36 = arith.mulf %8, %35 : vector<16x128xf32>
    %37 = arith.addf %33, %36 : vector<16x128xf32>
    %38 = vector.extract_strided_slice %9 {offsets = [5, 0], sizes = [1, 128], strides = [1, 1]} : vector<9x128xf32> to vector<1x128xf32>
    %39 = vector.broadcast %38 : vector<1x128xf32> to vector<16x128xf32>
    %40 = arith.mulf %19, %39 : vector<16x128xf32>
    %41 = arith.addf %37, %40 : vector<16x128xf32>
    %42 = vector.extract_strided_slice %9 {offsets = [6, 0], sizes = [1, 128], strides = [1, 1]} : vector<9x128xf32> to vector<1x128xf32>
    %43 = vector.broadcast %42 : vector<1x128xf32> to vector<16x128xf32>
    %44 = arith.mulf %14, %43 : vector<16x128xf32>
    %45 = vector.extract_strided_slice %9 {offsets = [7, 0], sizes = [1, 128], strides = [1, 1]} : vector<9x128xf32> to vector<1x128xf32>
    %46 = vector.broadcast %45 : vector<1x128xf32> to vector<16x128xf32>
    %47 = arith.mulf %8, %46 : vector<16x128xf32>
    %48 = arith.addf %44, %47 : vector<16x128xf32>
    %49 = vector.extract_strided_slice %9 {offsets = [8, 0], sizes = [1, 128], strides = [1, 1]} : vector<9x128xf32> to vector<1x128xf32>
    %50 = vector.broadcast %49 : vector<1x128xf32> to vector<16x128xf32>
    %51 = arith.mulf %19, %50 : vector<16x128xf32>
    %52 = arith.addf %48, %51 : vector<16x128xf32>
    %c1_i32 = arith.constant 1 : i32
    %53 = vector.broadcast %c1_i32 : i32 to vector<16x128xi32>
    %54 = arith.cmpi sge, %2, %53 : vector<16x128xi32>
    %c1_i32_11 = arith.constant 1 : i32
    %55 = tpu.dynamic_rotate %30 by %c1_i32_11 dim 0 : vector<16x128xf32>, i32 -> vector<16x128xf32>
    %cst_12 = arith.constant 0.000000e+00 : f32
    %56 = vector.broadcast %cst_12 : f32 to vector<16x128xf32>
    %57 = arith.select %54, %55, %56 : vector<16x128xi1>, vector<16x128xf32>
    %58 = arith.addf %41, %57 : vector<16x128xf32>
    %c15_i32 = arith.constant 15 : i32
    %59 = vector.broadcast %c15_i32 : i32 to vector<16x128xi32>
    %60 = arith.cmpi slt, %2, %59 : vector<16x128xi32>
    %c15_i32_13 = arith.constant 15 : i32
    %61 = tpu.dynamic_rotate %52 by %c15_i32_13 dim 0 : vector<16x128xf32>, i32 -> vector<16x128xf32>
    %cst_14 = arith.constant 0.000000e+00 : f32
    %62 = vector.broadcast %cst_14 : f32 to vector<16x128xf32>
    %63 = arith.select %60, %61, %62 : vector<16x128xi1>, vector<16x128xf32>
    %64 = arith.addf %58, %63 : vector<16x128xf32>
    %c0_15 = arith.constant 0 : index
    %c0_16 = arith.constant 0 : index
    %65 = vector.load %arg4[%c0_15, %c0_16] : memref<16x128xf32, #tpu.memory_space<vmem>>, vector<16x128xf32>
    %66 = arith.addf %64, %65 : vector<16x128xf32>
    %cst_17 = arith.constant 0.000000e+00 : f32
    %67 = vector.broadcast %cst_17 : f32 to vector<16x128xf32>
    %68 = arith.maximumf %66, %67 : vector<16x128xf32>
    %c0_18 = arith.constant 0 : index
    %c0_19 = arith.constant 0 : index
    %69 = vector.load %arg5[%c0_18, %c0_19] : memref<128x128xf32, #tpu.memory_space<vmem>>, vector<128x128xf32>
    %cst_20 = arith.constant dense<0.000000e+00> : vector<16x128xf32>
    %70 = tpu.matmul %68, %69, %cst_20 {dimension_numbers = #tpu.dot_dimension_numbers<[1], [0], [0], [1], [0, 0, 1, 1], [], []>} : vector<16x128xf32>, vector<128x128xf32>, vector<16x128xf32> -> vector<16x128xf32>
    %c0_21 = arith.constant 0 : index
    %c0_22 = arith.constant 0 : index
    %71 = vector.load %arg6[%c0_21, %c0_22] : memref<9x128xf32, #tpu.memory_space<vmem>>, vector<9x128xf32>
    %c8_i32_23 = arith.constant 8 : i32
    %72 = vector.broadcast %c8_i32_23 : i32 to vector<16x128xi32>
    %73 = arith.cmpi sge, %0, %72 : vector<16x128xi32>
    %c8_i32_24 = arith.constant 8 : i32
    %74 = tpu.dynamic_rotate %70 by %c8_i32_24 dim 1 : vector<16x128xf32>, i32 -> vector<16x128xf32>
    %cst_25 = arith.constant 0.000000e+00 : f32
    %75 = vector.broadcast %cst_25 : f32 to vector<16x128xf32>
    %76 = arith.select %73, %74, %75 : vector<16x128xi1>, vector<16x128xf32>
    %c120_i32_26 = arith.constant 120 : i32
    %77 = vector.broadcast %c120_i32_26 : i32 to vector<16x128xi32>
    %78 = arith.cmpi slt, %0, %77 : vector<16x128xi32>
    %c120_i32_27 = arith.constant 120 : i32
    %79 = tpu.dynamic_rotate %70 by %c120_i32_27 dim 1 : vector<16x128xf32>, i32 -> vector<16x128xf32>
    %cst_28 = arith.constant 0.000000e+00 : f32
    %80 = vector.broadcast %cst_28 : f32 to vector<16x128xf32>
    %81 = arith.select %78, %79, %80 : vector<16x128xi1>, vector<16x128xf32>
    %82 = vector.extract_strided_slice %71 {offsets = [0, 0], sizes = [1, 128], strides = [1, 1]} : vector<9x128xf32> to vector<1x128xf32>
    %83 = vector.broadcast %82 : vector<1x128xf32> to vector<16x128xf32>
    %84 = arith.mulf %76, %83 : vector<16x128xf32>
    %85 = vector.extract_strided_slice %71 {offsets = [1, 0], sizes = [1, 128], strides = [1, 1]} : vector<9x128xf32> to vector<1x128xf32>
    %86 = vector.broadcast %85 : vector<1x128xf32> to vector<16x128xf32>
    %87 = arith.mulf %70, %86 : vector<16x128xf32>
    %88 = arith.addf %84, %87 : vector<16x128xf32>
    %89 = vector.extract_strided_slice %71 {offsets = [2, 0], sizes = [1, 128], strides = [1, 1]} : vector<9x128xf32> to vector<1x128xf32>
    %90 = vector.broadcast %89 : vector<1x128xf32> to vector<16x128xf32>
    %91 = arith.mulf %81, %90 : vector<16x128xf32>
    %92 = arith.addf %88, %91 : vector<16x128xf32>
    %93 = vector.extract_strided_slice %71 {offsets = [3, 0], sizes = [1, 128], strides = [1, 1]} : vector<9x128xf32> to vector<1x128xf32>
    %94 = vector.broadcast %93 : vector<1x128xf32> to vector<16x128xf32>
    %95 = arith.mulf %76, %94 : vector<16x128xf32>
    %96 = vector.extract_strided_slice %71 {offsets = [4, 0], sizes = [1, 128], strides = [1, 1]} : vector<9x128xf32> to vector<1x128xf32>
    %97 = vector.broadcast %96 : vector<1x128xf32> to vector<16x128xf32>
    %98 = arith.mulf %70, %97 : vector<16x128xf32>
    %99 = arith.addf %95, %98 : vector<16x128xf32>
    %100 = vector.extract_strided_slice %71 {offsets = [5, 0], sizes = [1, 128], strides = [1, 1]} : vector<9x128xf32> to vector<1x128xf32>
    %101 = vector.broadcast %100 : vector<1x128xf32> to vector<16x128xf32>
    %102 = arith.mulf %81, %101 : vector<16x128xf32>
    %103 = arith.addf %99, %102 : vector<16x128xf32>
    %104 = vector.extract_strided_slice %71 {offsets = [6, 0], sizes = [1, 128], strides = [1, 1]} : vector<9x128xf32> to vector<1x128xf32>
    %105 = vector.broadcast %104 : vector<1x128xf32> to vector<16x128xf32>
    %106 = arith.mulf %76, %105 : vector<16x128xf32>
    %107 = vector.extract_strided_slice %71 {offsets = [7, 0], sizes = [1, 128], strides = [1, 1]} : vector<9x128xf32> to vector<1x128xf32>
    %108 = vector.broadcast %107 : vector<1x128xf32> to vector<16x128xf32>
    %109 = arith.mulf %70, %108 : vector<16x128xf32>
    %110 = arith.addf %106, %109 : vector<16x128xf32>
    %111 = vector.extract_strided_slice %71 {offsets = [8, 0], sizes = [1, 128], strides = [1, 1]} : vector<9x128xf32> to vector<1x128xf32>
    %112 = vector.broadcast %111 : vector<1x128xf32> to vector<16x128xf32>
    %113 = arith.mulf %81, %112 : vector<16x128xf32>
    %114 = arith.addf %110, %113 : vector<16x128xf32>
    %c1_i32_29 = arith.constant 1 : i32
    %115 = vector.broadcast %c1_i32_29 : i32 to vector<16x128xi32>
    %116 = arith.cmpi sge, %2, %115 : vector<16x128xi32>
    %c1_i32_30 = arith.constant 1 : i32
    %117 = tpu.dynamic_rotate %92 by %c1_i32_30 dim 0 : vector<16x128xf32>, i32 -> vector<16x128xf32>
    %cst_31 = arith.constant 0.000000e+00 : f32
    %118 = vector.broadcast %cst_31 : f32 to vector<16x128xf32>
    %119 = arith.select %116, %117, %118 : vector<16x128xi1>, vector<16x128xf32>
    %120 = arith.addf %103, %119 : vector<16x128xf32>
    %c15_i32_32 = arith.constant 15 : i32
    %121 = vector.broadcast %c15_i32_32 : i32 to vector<16x128xi32>
    %122 = arith.cmpi slt, %2, %121 : vector<16x128xi32>
    %c15_i32_33 = arith.constant 15 : i32
    %123 = tpu.dynamic_rotate %114 by %c15_i32_33 dim 0 : vector<16x128xf32>, i32 -> vector<16x128xf32>
    %cst_34 = arith.constant 0.000000e+00 : f32
    %124 = vector.broadcast %cst_34 : f32 to vector<16x128xf32>
    %125 = arith.select %122, %123, %124 : vector<16x128xi1>, vector<16x128xf32>
    %126 = arith.addf %120, %125 : vector<16x128xf32>
    %c0_35 = arith.constant 0 : index
    %c0_36 = arith.constant 0 : index
    %127 = vector.load %arg7[%c0_35, %c0_36] : memref<16x128xf32, #tpu.memory_space<vmem>>, vector<16x128xf32>
    %128 = arith.addf %126, %127 : vector<16x128xf32>
    %c8_i32_37 = arith.constant 8 : i32
    %129 = vector.broadcast %c8_i32_37 : i32 to vector<16x128xi32>
    %130 = arith.cmpi sge, %0, %129 : vector<16x128xi32>
    %c8_i32_38 = arith.constant 8 : i32
    %131 = tpu.dynamic_rotate %128 by %c8_i32_38 dim 1 : vector<16x128xf32>, i32 -> vector<16x128xf32>
    %cst_39 = arith.constant 0xFF800000 : f32
    %132 = vector.broadcast %cst_39 : f32 to vector<16x128xf32>
    %133 = arith.select %130, %131, %132 : vector<16x128xi1>, vector<16x128xf32>
    %c120_i32_40 = arith.constant 120 : i32
    %134 = vector.broadcast %c120_i32_40 : i32 to vector<16x128xi32>
    %135 = arith.cmpi slt, %0, %134 : vector<16x128xi32>
    %c120_i32_41 = arith.constant 120 : i32
    %136 = tpu.dynamic_rotate %128 by %c120_i32_41 dim 1 : vector<16x128xf32>, i32 -> vector<16x128xf32>
    %cst_42 = arith.constant 0xFF800000 : f32
    %137 = vector.broadcast %cst_42 : f32 to vector<16x128xf32>
    %138 = arith.select %135, %136, %137 : vector<16x128xi1>, vector<16x128xf32>
    %139 = arith.maximumf %133, %128 : vector<16x128xf32>
    %140 = arith.maximumf %139, %138 : vector<16x128xf32>
    %c1_i32_43 = arith.constant 1 : i32
    %141 = vector.broadcast %c1_i32_43 : i32 to vector<16x128xi32>
    %142 = arith.cmpi sge, %2, %141 : vector<16x128xi32>
    %c1_i32_44 = arith.constant 1 : i32
    %143 = tpu.dynamic_rotate %140 by %c1_i32_44 dim 0 : vector<16x128xf32>, i32 -> vector<16x128xf32>
    %cst_45 = arith.constant 0xFF800000 : f32
    %144 = vector.broadcast %cst_45 : f32 to vector<16x128xf32>
    %145 = arith.select %142, %143, %144 : vector<16x128xi1>, vector<16x128xf32>
    %c15_i32_46 = arith.constant 15 : i32
    %146 = vector.broadcast %c15_i32_46 : i32 to vector<16x128xi32>
    %147 = arith.cmpi slt, %2, %146 : vector<16x128xi32>
    %c15_i32_47 = arith.constant 15 : i32
    %148 = tpu.dynamic_rotate %140 by %c15_i32_47 dim 0 : vector<16x128xf32>, i32 -> vector<16x128xf32>
    %cst_48 = arith.constant 0xFF800000 : f32
    %149 = vector.broadcast %cst_48 : f32 to vector<16x128xf32>
    %150 = arith.select %147, %148, %149 : vector<16x128xi1>, vector<16x128xf32>
    %151 = arith.maximumf %145, %140 : vector<16x128xf32>
    %152 = arith.maximumf %151, %150 : vector<16x128xf32>
    %153 = vector.shape_cast %152 : vector<16x128xf32> to vector<1x16x128xf32>
    %c0_49 = arith.constant 0 : index
    %c0_50 = arith.constant 0 : index
    %c0_51 = arith.constant 0 : index
    %154 = vector.load %arg12[%c0_49, %c0_50, %c0_51] : memref<1x16x128xf32, #tpu.memory_space<vmem>>, vector<1x16x128xf32>
    tpu.vector_store %arg12[%c0_49, %c0_50, %c0_51], %153 {strides = array<i32>} : memref<1x16x128xf32, #tpu.memory_space<vmem>>, vector<1x16x128xf32>,
    %c0_52 = arith.constant 0 : index
    %c0_53 = arith.constant 0 : index
    %c0_54 = arith.constant 0 : index
    %155 = tpu.strided_load %arg12[%c0_52, %c0_53, %c0_54] {strides = array<i32: 1, 2, 1>} : memref<1x16x128xf32, #tpu.memory_space<vmem>>, vector<1x8x128xf32>
    %156 = vector.shape_cast %155 : vector<1x8x128xf32> to vector<8x128xf32>
    %c0_55 = arith.constant 0 : index
    %c0_56 = arith.constant 0 : index
    %157 = vector.load %arg10[%c0_55, %c0_56] : memref<128x64xf32, #tpu.memory_space<vmem>>, vector<128x64xf32>
    %cst_57 = arith.constant dense<0.000000e+00> : vector<8x64xf32>
    %158 = tpu.matmul %156, %157, %cst_57 {dimension_numbers = #tpu.dot_dimension_numbers<[1], [0], [0], [1], [0, 0, 1, 1], [], []>} : vector<8x128xf32>, vector<128x64xf32>, vector<8x64xf32> -> vector<8x64xf32>
    %c0_58 = arith.constant 0 : index
    %c0_59 = arith.constant 0 : index
    %c0_60 = arith.constant 0 : index
    %159 = tpu.strided_load %arg1[%c0_58, %c0_59, %c0_60] {strides = array<i32: 1, 2, 1>} : memref<1x16x64xf32, #tpu.memory_space<vmem>>, vector<1x8x64xf32>
    %160 = vector.shape_cast %159 : vector<1x8x64xf32> to vector<8x64xf32>
    %c0_61 = arith.constant 0 : index
    %c0_62 = arith.constant 0 : index
    %161 = vector.load %arg8[%c0_61, %c0_62] : memref<64x64xf32, #tpu.memory_space<vmem>>, vector<64x64xf32>
    %cst_63 = arith.constant dense<0.000000e+00> : vector<8x64xf32>
    %162 = tpu.matmul %160, %161, %cst_63 {dimension_numbers = #tpu.dot_dimension_numbers<[1], [0], [0], [1], [0, 0, 1, 1], [], []>} : vector<8x64xf32>, vector<64x64xf32>, vector<8x64xf32> -> vector<8x64xf32>
    %c0_64 = arith.constant 0 : index
    %c0_65 = arith.constant 0 : index
    %163 = vector.load %arg9[%c0_64, %c0_65] : memref<1x64xf32, #tpu.memory_space<vmem>>, vector<1x64xf32>
    %164 = vector.broadcast %163 : vector<1x64xf32> to vector<8x64xf32>
    %165 = arith.addf %162, %164 : vector<8x64xf32>
    %166 = arith.addf %158, %165 : vector<8x64xf32>
    %167 = vector.shape_cast %166 : vector<8x64xf32> to vector<1x8x64xf32>
    %c0_66 = arith.constant 0 : index
    %c0_67 = arith.constant 0 : index
    %c0_68 = arith.constant 0 : index
    %168 = vector.load %arg11[%c0_66, %c0_67, %c0_68] : memref<1x8x64xf32, #tpu.memory_space<vmem>>, vector<1x8x64xf32>
    tpu.vector_store %arg11[%c0_66, %c0_67, %c0_68], %167 {strides = array<i32>} : memref<1x8x64xf32, #tpu.memory_space<vmem>>, vector<1x8x64xf32>,
    return
  }
  func.func @transform_0(%arg0: i32) -> (i32, i32, i32) {
    %c0_i32 = arith.constant 0 : i32
    %c0_i32_0 = arith.constant 0 : i32
    %c0_i32_1 = arith.constant 0 : i32
    return %arg0, %c0_i32, %c0_i32_0 : i32, i32, i32
  }
  func.func @transform_1(%arg0: i32) -> (i32, i32) {
    %c0_i32 = arith.constant 0 : i32
    %c0_i32_0 = arith.constant 0 : i32
    %c0_i32_1 = arith.constant 0 : i32
    return %c0_i32, %c0_i32_0 : i32, i32
  }
  func.func @transform_2(%arg0: i32) -> (i32, i32) {
    %c0_i32 = arith.constant 0 : i32
    %c0_i32_0 = arith.constant 0 : i32
    %c0_i32_1 = arith.constant 0 : i32
    return %c0_i32, %c0_i32_0 : i32, i32
  }
  func.func @transform_3(%arg0: i32) -> (i32, i32) {
    %c0_i32 = arith.constant 0 : i32
    %c0_i32_0 = arith.constant 0 : i32
    %c0_i32_1 = arith.constant 0 : i32
    return %c0_i32, %c0_i32_0 : i32, i32
  }
  func.func @transform_4(%arg0: i32) -> (i32, i32) {
    %c0_i32 = arith.constant 0 : i32
    %c0_i32_0 = arith.constant 0 : i32
    %c0_i32_1 = arith.constant 0 : i32
    return %c0_i32, %c0_i32_0 : i32, i32
  }
  func.func @transform_5(%arg0: i32) -> (i32, i32) {
    %c0_i32 = arith.constant 0 : i32
    %c0_i32_0 = arith.constant 0 : i32
    %c0_i32_1 = arith.constant 0 : i32
    return %c0_i32, %c0_i32_0 : i32, i32
  }
  func.func @transform_6(%arg0: i32) -> (i32, i32) {
    %c0_i32 = arith.constant 0 : i32
    %c0_i32_0 = arith.constant 0 : i32
    %c0_i32_1 = arith.constant 0 : i32
    return %c0_i32, %c0_i32_0 : i32, i32
  }
  func.func @transform_7(%arg0: i32) -> (i32, i32) {
    %c0_i32 = arith.constant 0 : i32
    %c0_i32_0 = arith.constant 0 : i32
    %c0_i32_1 = arith.constant 0 : i32
    return %c0_i32, %c0_i32_0 : i32, i32
  }
  func.func @transform_8(%arg0: i32) -> (i32, i32) {
    %c0_i32 = arith.constant 0 : i32
    %c0_i32_0 = arith.constant 0 : i32
    %c0_i32_1 = arith.constant 0 : i32
    return %c0_i32, %c0_i32_0 : i32, i32
  }
  func.func @transform_9(%arg0: i32) -> (i32, i32) {
    %c0_i32 = arith.constant 0 : i32
    %c0_i32_0 = arith.constant 0 : i32
    %c0_i32_1 = arith.constant 0 : i32
    return %c0_i32, %c0_i32_0 : i32, i32
  }
  func.func @transform_10(%arg0: i32) -> (i32, i32, i32) {
    %c0_i32 = arith.constant 0 : i32
    %c0_i32_0 = arith.constant 0 : i32
    %c0_i32_1 = arith.constant 0 : i32
    return %arg0, %c0_i32, %c0_i32_0 : i32, i32, i32
  }
}

</mosaic_0001>

<llo_original>
// kernel: tpu_custom_call.1
$region0: #{tpu_custom_call.1}
  #allocation0 [shape = 'u32[]', space=smem, size = 0x4, offset = 0x4, fixed_abs, tag = 'smem constant byte address 0x4 - core index']
  #allocation1 [shape = 'u32[144,128]{1,0:T(1,128)}', space=vmem, size = 0x12000, scoped, tag = 'internal scratch']
  #allocation2 [shape = 'f32[1,16,128]{2,1,0:T(8,128)}', space=vmem, size = 0x2000, scoped, tag = 'scratch operand']
  %s0 = inlined_call_operand.hbm [shape: f32[2,16,64], index: 0, kind: input, shape index: {}]
  %s1 = inlined_call_operand.vmem [shape: f32[64,128], index: 1, kind: input, shape index: {}]
  %s2 = inlined_call_operand.hbm [shape: f32[9,128], index: 2, kind: input, shape index: {}]
  %s3 = inlined_call_operand.hbm [shape: f32[16,128], index: 3, kind: input, shape index: {}]
  %s4 = inlined_call_operand.vmem [shape: f32[128,128], index: 4, kind: input, shape index: {}]
  %s5 = inlined_call_operand.hbm [shape: f32[9,128], index: 5, kind: input, shape index: {}]
  %s6 = inlined_call_operand.hbm [shape: f32[16,128], index: 6, kind: input, shape index: {}]
  %s7 = inlined_call_operand.hbm [shape: f32[64,64], index: 7, kind: input, shape index: {}]
  %s8 = inlined_call_operand.vmem [shape: f32[1,64], index: 8, kind: input, shape index: {}]
  %s9 = inlined_call_operand.vmem [shape: f32[128,64], index: 9, kind: input, shape index: {}]
  %s10 = inlined_call_operand.hbm [shape: f32[2,8,64], index: 10, kind: output, shape index: {}]
  %s11 = sld [smem:[#allocation0]]
  $region97: #{tpu_custom_call.1} parent=0
    _
  %s13 = ssub.s32 1, %s11
  %s14 = scalar_select 0, %s13, %s11
  $region1: #{tpu_custom_call.1} parent=0
    #allocation3 [shape = 'u8[16384]{0}', space=vmem, size = 0x4000, scoped, tag = 'input window, operand 0']
    #allocation4 [shape = 's32[2]{0}', space=sflag, size = 0x8, scoped, tag = 'scoped memory for tpu_custom_call.1']
    #allocation5 [shape = 's32[2]{0}', space=sflag, size = 0x8, scoped, tag = 'scoped memory for tpu_custom_call.1']
    #allocation6 [shape = 'u8[8192]{0}', space=vmem, size = 0x2000, scoped, tag = 'input window, operand 2, single buffered']
    #allocation7 [shape = 's32[1]{0}', space=sflag, size = 0x4, scoped, tag = 'scoped memory for tpu_custom_call.1']
    #allocation8 [shape = 'u8[8192]{0}', space=vmem, size = 0x2000, scoped, tag = 'input window, operand 3, single buffered']
    #allocation9 [shape = 'u8[8192]{0}', space=vmem, size = 0x2000, scoped, tag = 'input window, operand 5, single buffered']
    #allocation10 [shape = 's32[1]{0}', space=sflag, size = 0x4, scoped, tag = 'scoped memory for tpu_custom_call.1']
    #allocation11 [shape = 'u8[8192]{0}', space=vmem, size = 0x2000, scoped, tag = 'input window, operand 6, single buffered']
    #allocation12 [shape = 'u8[32768]{0}', space=vmem, size = 0x8000, scoped, tag = 'input window, operand 7, single buffered']
    #allocation13 [shape = 's32[1]{0}', space=sflag, size = 0x4, scoped, tag = 'scoped memory for tpu_custom_call.1']
    #allocation14 [shape = 'u8[8192]{0}', space=vmem, size = 0x2000, scoped, tag = 'output window, operand 0']
    %15 = vsyncpa [#allocation4], 0
    %s16 = scalar_lea.sflag [#allocation4], 1
    %17 = vsyncpa %s16, 0
    %18 = vsyncpa [#allocation7], 0
    %19 = vsyncpa [#allocation10], 0
    %20 = vsyncpa [#allocation13], 0
    %21 = vsyncpa [#allocation5], 0
    %s22 = scalar_lea.sflag [#allocation5], 1
    %23 = vsyncpa %s22, 0
    loop: start=0, step=1, limit=4
    $region2: #{tpu_custom_call.1} parent=1 // loop_pre_header
      _
    $region3: #{tpu_custom_call.1} parent=1 // loop_header
      %s25 = sphi 0, %s29
      %p26 = scmp.ge.s32.totalorder %s25, 4
      %s35 = sphi 0, %s37
      %s38 = sphi 0, %s35
      %s39 = sphi 0, %s38
      %s55 = sphi 0, %s39
      %s59 = sphi 0, %s59
      %s61 = sphi 0, %s59
      %s62 = sphi 0, %s61
      %s76 = sphi 0, %s62
      %s80 = sphi 0, %s80
      %s82 = sphi 0, %s80
      %s83 = sphi 0, %s82
      %s97 = sphi 0, %s83
      %s101 = sphi 0, %s101
      %s103 = sphi 0, %s101
      %s104 = sphi 0, %s103
      %s118 = sphi 0, %s104
      %s122 = sphi 0, %s122
      %s124 = sphi 0, %s122
      %s125 = sphi 0, %s124
      %s139 = sphi 0, %s125
      %s143 = sphi 0, %s143
      %s145 = sphi 0, %s143
      %s146 = sphi 0, %s145
      %s160 = sphi 0, %s146
      %s164 = sphi 0, %s164
      %s166 = sphi 0, %s164
      %s167 = sphi 0, %s166
      %s181 = sphi 0, %s167
      %s185 = sphi 0, %s185
      %s187 = sphi 0, %s185
      %s188 = sphi 0, %s187
      %s202 = sphi 0, %s188
      %s206 = sphi 0, %s206
      %s208 = sphi 0, %s206
      %s209 = sphi 0, %s208
      %s223 = sphi 0, %s209
      %s227 = sphi 0, %s227
      %s229 = sphi 0, %s227
      %s230 = sphi 0, %s229
      %s244 = sphi 0, %s230
      %s250 = sphi 0, %s252
      %s253 = sphi 0, %s250
      %s254 = sphi 0, %s253
      %s270 = sphi 0, %s254
    $region4: #{tpu_custom_call.1} parent=1 // loop_header_branch
      %28 = sbr.rel (%p26) target = $region8
    $region5: #{tpu_custom_call.1} parent=1 // loop_body
      %s30 = ssub.s32 %s25, 1
      %s31 = ssub.s32 %s25, 2
      %s32 = sadd.s32 %s25, 1
      %s33 = ssub.s32 %s25, %s32
      %p34 = scmp.eq.s32.totalorder %s33, 0
      %s36 = sadd.s32 %s35, 1
      %s37 = scalar_select %p34, %s35, %s36
      %p40 = pneg %p34
      %p41 = scmp.eq.s32.totalorder %s25, 1
      %p42 = por %p40, %p41
      %p43 = scmp.ne.s32.totalorder %s35, %s38
      %p44 = scmp.eq.s32.totalorder %s25, 0
      %p45 = por %p43, %p44
      %p46 = scmp.ne.s32.totalorder %s35, %s38
      %p47 = scmp.eq.s32.totalorder %s30, 1
      %p48 = por %p46, %p47
      %p49 = scmp.ne.s32.totalorder %s38, %s39
      %p50 = scmp.eq.s32.totalorder %s30, 0
      %p51 = por %p49, %p50
      %p52 = scmp.ne.s32.totalorder %s38, %s39
      %p53 = scmp.eq.s32.totalorder %s31, 1
      %p54 = por %p52, %p53
      %p56 = scmp.ne.s32.totalorder %s39, %s55
      %p57 = scmp.eq.s32.totalorder %s31, 0
      %p58 = por %p56, %p57
      %s60 = sadd.s32 %s59, 1
      %p63 = scmp.eq.s32.totalorder %s25, 1
      %p64 = scmp.ne.s32.totalorder %s59, %s61
      %p65 = scmp.eq.s32.totalorder %s25, 0
      %p66 = por %p64, %p65
      %p67 = scmp.ne.s32.totalorder %s59, %s61
      %p68 = scmp.eq.s32.totalorder %s30, 1
      %p69 = por %p67, %p68
      %p70 = scmp.ne.s32.totalorder %s61, %s62
      %p71 = scmp.eq.s32.totalorder %s30, 0
      %p72 = por %p70, %p71
      %p73 = scmp.ne.s32.totalorder %s61, %s62
      %p74 = scmp.eq.s32.totalorder %s31, 1
      %p75 = por %p73, %p74
      %p77 = scmp.ne.s32.totalorder %s62, %s76
      %p78 = scmp.eq.s32.totalorder %s31, 0
      %p79 = por %p77, %p78
      %s81 = sadd.s32 %s80, 1
      %p84 = scmp.eq.s32.totalorder %s25, 1
      %p85 = scmp.ne.s32.totalorder %s80, %s82
      %p86 = scmp.eq.s32.totalorder %s25, 0
      %p87 = por %p85, %p86
      %p88 = scmp.ne.s32.totalorder %s80, %s82
      %p89 = scmp.eq.s32.totalorder %s30, 1
      %p90 = por %p88, %p89
      %p91 = scmp.ne.s32.totalorder %s82, %s83
      %p92 = scmp.eq.s32.totalorder %s30, 0
      %p93 = por %p91, %p92
      %p94 = scmp.ne.s32.totalorder %s82, %s83
      %p95 = scmp.eq.s32.totalorder %s31, 1
      %p96 = por %p94, %p95
      %p98 = scmp.ne.s32.totalorder %s83, %s97
      %p99 = scmp.eq.s32.totalorder %s31, 0
      %p100 = por %p98, %p99
      %s102 = sadd.s32 %s101, 1
      %p105 = scmp.eq.s32.totalorder %s25, 1
      %p106 = scmp.ne.s32.totalorder %s101, %s103
      %p107 = scmp.eq.s32.totalorder %s25, 0
      %p108 = por %p106, %p107
      %p109 = scmp.ne.s32.totalorder %s101, %s103
      %p110 = scmp.eq.s32.totalorder %s30, 1
      %p111 = por %p109, %p110
      %p112 = scmp.ne.s32.totalorder %s103, %s104
      %p113 = scmp.eq.s32.totalorder %s30, 0
      %p114 = por %p112, %p113
      %p115 = scmp.ne.s32.totalorder %s103, %s104
      %p116 = scmp.eq.s32.totalorder %s31, 1
      %p117 = por %p115, %p116
      %p119 = scmp.ne.s32.totalorder %s104, %s118
      %p120 = scmp.eq.s32.totalorder %s31, 0
      %p121 = por %p119, %p120
      %s123 = sadd.s32 %s122, 1
      %p126 = scmp.eq.s32.totalorder %s25, 1
      %p127 = scmp.ne.s32.totalorder %s122, %s124
      %p128 = scmp.eq.s32.totalorder %s25, 0
      %p129 = por %p127, %p128
      %p130 = scmp.ne.s32.totalorder %s122, %s124
      %p131 = scmp.eq.s32.totalorder %s30, 1
      %p132 = por %p130, %p131
      %p133 = scmp.ne.s32.totalorder %s124, %s125
      %p134 = scmp.eq.s32.totalorder %s30, 0
      %p135 = por %p133, %p134
      %p136 = scmp.ne.s32.totalorder %s124, %s125
      %p137 = scmp.eq.s32.totalorder %s31, 1
      %p138 = por %p136, %p137
      %p140 = scmp.ne.s32.totalorder %s125, %s139
      %p141 = scmp.eq.s32.totalorder %s31, 0
      %p142 = por %p140, %p141
      %s144 = sadd.s32 %s143, 1
      %p147 = scmp.eq.s32.totalorder %s25, 1
      %p148 = scmp.ne.s32.totalorder %s143, %s145
      %p149 = scmp.eq.s32.totalorder %s25, 0
      %p150 = por %p148, %p149
      %p151 = scmp.ne.s32.totalorder %s143, %s145
      %p152 = scmp.eq.s32.totalorder %s30, 1
      %p153 = por %p151, %p152
      %p154 = scmp.ne.s32.totalorder %s145, %s146
      %p155 = scmp.eq.s32.totalorder %s30, 0
      %p156 = por %p154, %p155
      %p157 = scmp.ne.s32.totalorder %s145, %s146
      %p158 = scmp.eq.s32.totalorder %s31, 1
      %p159 = por %p157, %p158
      %p161 = scmp.ne.s32.totalorder %s146, %s160
      %p162 = scmp.eq.s32.totalorder %s31, 0
      %p163 = por %p161, %p162
      %s165 = sadd.s32 %s164, 1
      %p168 = scmp.eq.s32.totalorder %s25, 1
      %p169 = scmp.ne.s32.totalorder %s164, %s166
      %p170 = scmp.eq.s32.totalorder %s25, 0
      %p171 = por %p169, %p170
      %p172 = scmp.ne.s32.totalorder %s164, %s166
      %p173 = scmp.eq.s32.totalorder %s30, 1
      %p174 = por %p172, %p173
      %p175 = scmp.ne.s32.totalorder %s166, %s167
      %p176 = scmp.eq.s32.totalorder %s30, 0
      %p177 = por %p175, %p176
      %p178 = scmp.ne.s32.totalorder %s166, %s167
      %p179 = scmp.eq.s32.totalorder %s31, 1
      %p180 = por %p178, %p179
      %p182 = scmp.ne.s32.totalorder %s167, %s181
      %p183 = scmp.eq.s32.totalorder %s31, 0
      %p184 = por %p182, %p183
      %s186 = sadd.s32 %s185, 1
      %p189 = scmp.eq.s32.totalorder %s25, 1
      %p190 = scmp.ne.s32.totalorder %s185, %s187
      %p191 = scmp.eq.s32.totalorder %s25, 0
      %p192 = por %p190, %p191
      %p193 = scmp.ne.s32.totalorder %s185, %s187
      %p194 = scmp.eq.s32.totalorder %s30, 1
      %p195 = por %p193, %p194
      %p196 = scmp.ne.s32.totalorder %s187, %s188
      %p197 = scmp.eq.s32.totalorder %s30, 0
      %p198 = por %p196, %p197
      %p199 = scmp.ne.s32.totalorder %s187, %s188
      %p200 = scmp.eq.s32.totalorder %s31, 1
      %p201 = por %p199, %p200
      %p203 = scmp.ne.s32.totalorder %s188, %s202
      %p204 = scmp.eq.s32.totalorder %s31, 0
      %p205 = por %p203, %p204
      %s207 = sadd.s32 %s206, 1
      %p210 = scmp.eq.s32.totalorder %s25, 1
      %p211 = scmp.ne.s32.totalorder %s206, %s208
      %p212 = scmp.eq.s32.totalorder %s25, 0
      %p213 = por %p211, %p212
      %p214 = scmp.ne.s32.totalorder %s206, %s208
      %p215 = scmp.eq.s32.totalorder %s30, 1
      %p216 = por %p214, %p215
      %p217 = scmp.ne.s32.totalorder %s208, %s209
      %p218 = scmp.eq.s32.totalorder %s30, 0
      %p219 = por %p217, %p218
      %p220 = scmp.ne.s32.totalorder %s208, %s209
      %p221 = scmp.eq.s32.totalorder %s31, 1
      %p222 = por %p220, %p221
      %p224 = scmp.ne.s32.totalorder %s209, %s223
      %p225 = scmp.eq.s32.totalorder %s31, 0
      %p226 = por %p224, %p225
      %s228 = sadd.s32 %s227, 1
      %p231 = scmp.eq.s32.totalorder %s25, 1
      %p232 = scmp.ne.s32.totalorder %s227, %s229
      %p233 = scmp.eq.s32.totalorder %s25, 0
      %p234 = por %p232, %p233
      %p235 = scmp.ne.s32.totalorder %s227, %s229
      %p236 = scmp.eq.s32.totalorder %s30, 1
      %p237 = por %p235, %p236
      %p238 = scmp.ne.s32.totalorder %s229, %s230
      %p239 = scmp.eq.s32.totalorder %s30, 0
      %p240 = por %p238, %p239
      %p241 = scmp.ne.s32.totalorder %s229, %s230
      %p242 = scmp.eq.s32.totalorder %s31, 1
      %p243 = por %p241, %p242
      %p245 = scmp.ne.s32.totalorder %s230, %s244
      %p246 = scmp.eq.s32.totalorder %s31, 0
      %p247 = por %p245, %p246
      %s248 = ssub.s32 %s25, %s32
      %p249 = scmp.eq.s32.totalorder %s248, 0
      %s251 = sadd.s32 %s250, 1
      %s252 = scalar_select %p249, %s250, %s251
      %p255 = pneg %p249
      %p256 = scmp.eq.s32.totalorder %s25, 1
      %p257 = por %p255, %p256
      %p258 = scmp.ne.s32.totalorder %s250, %s253
      %p259 = scmp.eq.s32.totalorder %s25, 0
      %p260 = por %p258, %p259
      %p261 = scmp.ne.s32.totalorder %s250, %s253
      %p262 = scmp.eq.s32.totalorder %s30, 1
      %p263 = por %p261, %p262
      %p264 = scmp.ne.s32.totalorder %s253, %s254
      %p265 = scmp.eq.s32.totalorder %s30, 0
      %p266 = por %p264, %p265
      %p267 = scmp.ne.s32.totalorder %s253, %s254
      %p268 = scmp.eq.s32.totalorder %s31, 1
      %p269 = por %p267, %p268
      %p271 = scmp.ne.s32.totalorder %s254, %s270
      %p272 = scmp.eq.s32.totalorder %s31, 0
      %p273 = por %p271, %p272
      %p274 = scmp.le.s32.totalorder 1, %s25
      %p275 = scmp.lt.s32.totalorder %s25, 3
      %p276 = pnand %p274, %p275
      %p277 = pneg %p276
      // Predicated region
      $region9: #{tpu_custom_call.1} parent=5 // pred_check
        _
      $region10: #{tpu_custom_call.1} parent=5 // pred_check_branch
        %279 = sbr.rel (%p276) target = $region12
      $region11: #{tpu_custom_call.1} parent=5 // pred_region
        %s280 = ssub.s32 %s25, 1
        // Predicated region
        $region13: #{tpu_custom_call.1} parent=11 // pred_check
          %p281 = pneg %p72
        $region14: #{tpu_custom_call.1} parent=11 // pred_check_branch
          %283 = sbr.rel (%p281) target = $region16
        $region15: #{tpu_custom_call.1} parent=11 // pred_region
          _
        $region16: #{tpu_custom_call.1} parent=11 // pred_fallthru
          _
        // Predicated region
        $region17: #{tpu_custom_call.1} parent=11 // pred_check
          %p284 = pneg %p93
        $region18: #{tpu_custom_call.1} parent=11 // pred_check_branch
          %286 = sbr.rel (%p284) target = $region20
        $region19: #{tpu_custom_call.1} parent=11 // pred_region
          %s288 = ssub.s32 256, 256
          %289 = vsyncadd [#allocation7], %s288
          %s290 = sshll.u32 [#allocation6], 4
          %s291 = int_to_ptr.vmem [resolvable:$true] %s290
          %296 = dma.hbm_to_vmem [thread:$0]  %s2, 256, %s291, [#allocation7], 128, 128, 8
        $region20: #{tpu_custom_call.1} parent=11 // pred_fallthru
          _
        // Predicated region
        $region21: #{tpu_custom_call.1} parent=11 // pred_check
          %p297 = pneg %p114
        $region22: #{tpu_custom_call.1} parent=11 // pred_check_branch
          %299 = sbr.rel (%p297) target = $region24
        $region23: #{tpu_custom_call.1} parent=11 // pred_region
          %s301 = ssub.s32 256, 256
          %302 = vsyncadd [#allocation7], %s301
          %s303 = sshll.u32 [#allocation8], 4
          %s304 = int_to_ptr.vmem [resolvable:$true] %s303
          %309 = dma.hbm_to_vmem [thread:$0]  %s3, 256, %s304, [#allocation7], 128, 128, 8
        $region24: #{tpu_custom_call.1} parent=11 // pred_fallthru
          _
        // Predicated region
        $region25: #{tpu_custom_call.1} parent=11 // pred_check
          %p310 = pneg %p135
        $region26: #{tpu_custom_call.1} parent=11 // pred_check_branch
          %312 = sbr.rel (%p310) target = $region28
        $region27: #{tpu_custom_call.1} parent=11 // pred_region
          _
        $region28: #{tpu_custom_call.1} parent=11 // pred_fallthru
          _
        // Predicated region
        $region29: #{tpu_custom_call.1} parent=11 // pred_check
          %p313 = pneg %p156
        $region30: #{tpu_custom_call.1} parent=11 // pred_check_branch
          %315 = sbr.rel (%p313) target = $region32
        $region31: #{tpu_custom_call.1} parent=11 // pred_region
          %s317 = ssub.s32 256, 256
          %318 = vsyncadd [#allocation10], %s317
          %s319 = sshll.u32 [#allocation9], 4
          %s320 = int_to_ptr.vmem [resolvable:$true] %s319
          %325 = dma.hbm_to_vmem [thread:$0]  %s5, 256, %s320, [#allocation10], 128, 128, 8
        $region32: #{tpu_custom_call.1} parent=11 // pred_fallthru
          _
        // Predicated region
        $region33: #{tpu_custom_call.1} parent=11 // pred_check
          %p326 = pneg %p177
        $region34: #{tpu_custom_call.1} parent=11 // pred_check_branch
          %328 = sbr.rel (%p326) target = $region36
        $region35: #{tpu_custom_call.1} parent=11 // pred_region
          %s330 = ssub.s32 256, 256
          %331 = vsyncadd [#allocation10], %s330
          %s332 = sshll.u32 [#allocation11], 4
          %s333 = int_to_ptr.vmem [resolvable:$true] %s332
          %338 = dma.hbm_to_vmem [thread:$0]  %s6, 256, %s333, [#allocation10], 128, 128, 8
        $region36: #{tpu_custom_call.1} parent=11 // pred_fallthru
          _
        // Predicated region
        $region37: #{tpu_custom_call.1} parent=11 // pred_check
          %p339 = pneg %p198
        $region38: #{tpu_custom_call.1} parent=11 // pred_check_branch
          %341 = sbr.rel (%p339) target = $region40
        $region39: #{tpu_custom_call.1} parent=11 // pred_region
          %s343 = ssub.s32 1024, 1024
          %344 = vsyncadd [#allocation13], %s343
          %s345 = sshll.u32 [#allocation12], 4
          %s346 = int_to_ptr.vmem [resolvable:$true] %s345
          %351 = dma.hbm_to_vmem [thread:$0]  %s7, 1024, %s346, [#allocation13], 128, 128, 8
        $region40: #{tpu_custom_call.1} parent=11 // pred_fallthru
          _
        // Predicated region
        $region41: #{tpu_custom_call.1} parent=11 // pred_check
          %p352 = pneg %p219
        $region42: #{tpu_custom_call.1} parent=11 // pred_check_branch
          %354 = sbr.rel (%p352) target = $region44
        $region43: #{tpu_custom_call.1} parent=11 // pred_region
          _
        $region44: #{tpu_custom_call.1} parent=11 // pred_fallthru
          _
        // Predicated region
        $region45: #{tpu_custom_call.1} parent=11 // pred_check
          %p355 = pneg %p240
        $region46: #{tpu_custom_call.1} parent=11 // pred_check_branch
          %357 = sbr.rel (%p355) target = $region48
        $region47: #{tpu_custom_call.1} parent=11 // pred_region
          _
        $region48: #{tpu_custom_call.1} parent=11 // pred_fallthru
          _
      $region12: #{tpu_custom_call.1} parent=5 // pred_fallthru
        _
      %p358 = scmp.lt.s32.totalorder %s25, 2
      // Predicated region
      $region49: #{tpu_custom_call.1} parent=5 // pred_check
        %p359 = pneg %p358
      $region50: #{tpu_custom_call.1} parent=5 // pred_check_branch
        %361 = sbr.rel (%p359) target = $region52
      $region51: #{tpu_custom_call.1} parent=5 // pred_region
        // Predicated region
        $region53: #{tpu_custom_call.1} parent=51 // pred_check
          %p362 = pneg %p45
        $region54: #{tpu_custom_call.1} parent=51 // pred_check_branch
          %364 = sbr.rel (%p362) target = $region56
        $region55: #{tpu_custom_call.1} parent=51 // pred_region
          %s365 = sand.u32 %s35, 1
          %s366 = scalar_lea.sflag [#allocation4], %s365
          %s367 = sand.u32 %s35, 1
          %s368 = smul.addr %s367, 16
          %s369 = scalar_lea.vmem [#allocation3], %s368
          %s371 = ssub.s32 256, 256
          %372 = vsyncadd %s366, %s371
          %s373 = smul.addr %s25, 2
          %s374 = smul.addr %s373, 128
          %s375 = scalar_lea.hbm %s0, %s374
          %s376 = sshll.u32 %s369, 4
          %s377 = int_to_ptr.vmem [resolvable:$true] %s376
          %382 = dma.hbm_to_vmem [thread:$0]  %s375, 256, %s377, %s366, 128, 128, 8
        $region56: #{tpu_custom_call.1} parent=51 // pred_fallthru
          _
      $region52: #{tpu_custom_call.1} parent=5 // pred_fallthru
        _
      %p383 = scmp.le.s32.totalorder 1, %s25
      %p384 = scmp.lt.s32.totalorder %s25, 3
      %p385 = pnand %p383, %p384
      %p386 = pneg %p385
      // Predicated region
      $region57: #{tpu_custom_call.1} parent=5 // pred_check
        _
      $region58: #{tpu_custom_call.1} parent=5 // pred_check_branch
        %388 = sbr.rel (%p385) target = $region60
      $region59: #{tpu_custom_call.1} parent=5 // pred_region
        %s389 = ssub.s32 %s25, 1
        %s390 = sand.u32 %s38, 1
        %s391 = scalar_lea.sflag [#allocation4], %s390
        %s392 = sand.u32 %s38, 1
        %s393 = smul.addr %s392, 16
        %s394 = scalar_lea.vmem [#allocation3], %s393
        // Predicated region
        $region61: #{tpu_custom_call.1} parent=59 // pred_check
          %p395 = pneg %p51
        $region62: #{tpu_custom_call.1} parent=59 // pred_check_branch
          %397 = sbr.rel (%p395) target = $region64
        $region63: #{tpu_custom_call.1} parent=59 // pred_region
          %398 = dma.done %s391, 256
        $region64: #{tpu_custom_call.1} parent=59 // pred_fallthru
          _
        // Predicated region
        $region65: #{tpu_custom_call.1} parent=59 // pred_check
          %p399 = pneg %p93
        $region66: #{tpu_custom_call.1} parent=59 // pred_check_branch
          %401 = sbr.rel (%p399) target = $region68
        $region67: #{tpu_custom_call.1} parent=59 // pred_region
          %402 = dma.done [#allocation7], 256
        $region68: #{tpu_custom_call.1} parent=59 // pred_fallthru
          _
        // Predicated region
        $region69: #{tpu_custom_call.1} parent=59 // pred_check
          %p403 = pneg %p114
        $region70: #{tpu_custom_call.1} parent=59 // pred_check_branch
          %405 = sbr.rel (%p403) target = $region72
        $region71: #{tpu_custom_call.1} parent=59 // pred_region
          %406 = dma.done [#allocation7], 256
        $region72: #{tpu_custom_call.1} parent=59 // pred_fallthru
          _
        // Predicated region
        $region73: #{tpu_custom_call.1} parent=59 // pred_check
          %p407 = pneg %p156
        $region74: #{tpu_custom_call.1} parent=59 // pred_check_branch
          %409 = sbr.rel (%p407) target = $region76
        $region75: #{tpu_custom_call.1} parent=59 // pred_region
          %410 = dma.done [#allocation10], 256
        $region76: #{tpu_custom_call.1} parent=59 // pred_fallthru
          _
        // Predicated region
        $region77: #{tpu_custom_call.1} parent=59 // pred_check
          %p411 = pneg %p177
        $region78: #{tpu_custom_call.1} parent=59 // pred_check_branch
          %413 = sbr.rel (%p411) target = $region80
        $region79: #{tpu_custom_call.1} parent=59 // pred_region
          %414 = dma.done [#allocation10], 256
        $region80: #{tpu_custom_call.1} parent=59 // pred_fallthru
          _
        // Predicated region
        $region81: #{tpu_custom_call.1} parent=59 // pred_check
          %p415 = pneg %p198
        $region82: #{tpu_custom_call.1} parent=59 // pred_check_branch
          %417 = sbr.rel (%p415) target = $region84
        $region83: #{tpu_custom_call.1} parent=59 // pred_region
          %418 = dma.done [#allocation13], 1024
        $region84: #{tpu_custom_call.1} parent=59 // pred_fallthru
          _
        %s419 = sand.u32 %s38, 1
        %s420 = scalar_lea.sflag [#allocation4], %s419
        %s421 = sand.u32 %s38, 1
        %s422 = smul.addr %s421, 16
        %s423 = scalar_lea.vmem [#allocation3], %s422
        %p424 = pneg %p51
        %p425 = pneg %p48
        %p426 = pneg %p72
        %p427 = pneg %p69
        %p428 = pneg %p93
        %p429 = pneg %p90
        %p430 = pneg %p114
        %p431 = pneg %p111
        %p432 = pneg %p135
        %p433 = pneg %p132
        %p434 = pneg %p156
        %p435 = pneg %p153
        %p436 = pneg %p177
        %p437 = pneg %p174
        %p438 = pneg %p198
        %p439 = pneg %p195
        %p440 = pneg %p219
        %p441 = pneg %p216
        %p442 = pneg %p240
        %p443 = pneg %p237
        %p444 = pneg %p266
        %p445 = pneg %p263
        %s446 = sand.u32 %s253, 1
        %s447 = scalar_lea.sflag [#allocation5], %s446
        %s448 = sand.u32 %s253, 1
        %s449 = smul.addr %s448, 8
        %s450 = scalar_lea.vmem [#allocation14], %s449
        %v451 = vlaneseq
        %v452 = vand.u32 %v451, 127
        %v453 = vlaneseq
        %v454 = vshrl.u32 %v453, 7
        %v455 = vadd.s32 %v454, 8
        %v456 = vld [vmem:[%s394] sm:$0xff]
        %v457 = vld [vmem:[%s394 + $0x8] sm:$0xff]
        %v458 = vmax.f32 %v456, 0.0
        %v459 = vmax.f32 %v457, 0.0
        %v460 = vld [vmem:[%s1] sm:$0xff]
        %v461 = vld [vmem:[%s1 + $0x8] sm:$0xff]
        %v462 = vld [vmem:[%s1 + $0x10] sm:$0xff]
        %v463 = vld [vmem:[%s1 + $0x18] sm:$0xff]
        %v464 = vld [vmem:[%s1 + $0x20] sm:$0xff]
        %v465 = vld [vmem:[%s1 + $0x28] sm:$0xff]
        %v466 = vld [vmem:[%s1 + $0x30] sm:$0xff]
        %v467 = vld [vmem:[%s1 + $0x38] sm:$0xff]
        %vm468 = vcmask 523264
        %v470 = vsel %vm468, %v458, 0
        %v473 = vsel %vm468, %v459, 0
        %475 = vmatprep.subr.mxu0 0.0
        %476 = vmatpush1.msra.mxu0 0.0
        %477 = vmatprep.subr.mxu0 0.0
        %478 = vmatpush1.msra.mxu0 0.0
        %479 = vmatprep.subr.mxu0 0.0
        %480 = vmatpush1.msra.mxu0 0.0
        %481 = vmatprep.subr.mxu0 0.0
        %482 = vmatpush1.msra.mxu0 0.0
        %483 = vmatprep.subr.mxu0 0.0
        %484 = vmatpush1.msra.mxu0 0.0
        %485 = vmatprep.subr.mxu0 0.0
        %486 = vmatpush1.msra.mxu0 0.0
        %487 = vmatprep.subr.mxu0 0.0
        %488 = vmatpush1.msra.mxu0 0.0
        %489 = vmatprep.subr.mxu0 0.0
        %490 = vmatpush1.msra.mxu0 0.0
        %491 = vmatprep.subr.mxu0 0.0
        %492 = vmatpush1.msra.mxu0 %v467
        %493 = vmatprep.subr.mxu0 0.0
        %494 = vmatpush1.msra.mxu0 %v466
        %495 = vmatprep.subr.mxu0 0.0
        %496 = vmatpush1.msra.mxu0 %v465
        %497 = vmatprep.subr.mxu0 0.0
        %498 = vmatpush1.msra.mxu0 %v464
        %499 = vmatprep.subr.mxu0 0.0
        %500 = vmatpush1.msra.mxu0 %v463
        %501 = vmatprep.subr.mxu0 0.0
        %502 = vmatpush1.msra.mxu0 %v462
        %503 = vmatprep.subr.mxu0 0.0
        %504 = vmatpush1.msra.mxu0 %v461
        %505 = vmatprep.subr.mxu0 0.0
        %506 = vmatpush1.msra.mxu0 %v460
        %507 = vmatprep.subr.mxu0 0.0
        %508 = vmatpush2.msra.mxu0 0.0
        %509 = vmatprep.subr.mxu0 0.0
        %510 = vmatpush2.msra.mxu0 0.0
        %511 = vmatprep.subr.mxu0 0.0
        %512 = vmatpush2.msra.mxu0 0.0
        %513 = vmatprep.subr.mxu0 0.0
        %514 = vmatpush2.msra.mxu0 0.0
        %515 = vmatprep.subr.mxu0 0.0
        %516 = vmatpush2.msra.mxu0 0.0
        %517 = vmatprep.subr.mxu0 0.0
        %518 = vmatpush2.msra.mxu0 0.0
        %519 = vmatprep.subr.mxu0 0.0
        %520 = vmatpush2.msra.mxu0 0.0
        %521 = vmatprep.subr.mxu0 0.0
        %522 = vmatpush2.msra.mxu0 0.0
        %523 = vmatprep.subr.mxu0 0.0
        %524 = vmatpush2.msra.mxu0 0.0
        %525 = vmatprep.subr.mxu0 0.0
        %526 = vmatpush2.msra.mxu0 0.0
        %527 = vmatprep.subr.mxu0 0.0
        %528 = vmatpush2.msra.mxu0 0.0
        %529 = vmatprep.subr.mxu0 0.0
        %530 = vmatpush2.msra.mxu0 0.0
        %531 = vmatprep.subr.mxu0 0.0
        %532 = vmatpush2.msra.mxu0 0.0
        %533 = vmatprep.subr.mxu0 0.0
        %534 = vmatpush2.msra.mxu0 0.0
        %535 = vmatprep.subr.mxu0 0.0
        %536 = vmatpush2.msra.mxu0 0.0
        %537 = vmatprep.subr.mxu0 0.0
        %538 = vmatpush2.msra.mxu0 0.0
        %539 = vmatprep.mubr.f32.mxu0 0.0
        %540 = vmatmul.mubr.f32.gmra.mxu0 %v470
        %v541 = vpop.f32.mrf.mxu0
        %v542 = vadd.f32 0.0, %v541
        %v543 = vpop.f32.mrf.mxu0
        %544 = vmatprep.mubr.f32.mxu0 0.0
        %545 = vmatmul.mubr.f32.gmra.mxu0 %v473
        %v546 = vpop.f32.mrf.mxu0
        %v547 = vadd.f32 0.0, %v546
        %v548 = vpop.f32.mrf.mxu0
        %549 = vdwg.mxu0
        %v550 = vld [vmem:[#allocation6] sm:$0xff]
        %v551 = vld [vmem:[#allocation6 + $0x8] sm:$0x1]
        %vm552 = vcmp.ge.s32.totalorder %v452, 8
        %553 = vrot.lane.b32.xlu0 %v542, 8
        %v554 = vpop.permute.xlu0 %553
        %555 = vrot.lane.b32.xlu0 %v547, 8
        %v556 = vpop.permute.xlu0 %555
        %v557 = vsel %vm552, %v554, 0.0
        %v558 = vsel %vm552, %v556, 0.0
        %vm559 = vcmp.lt.s32.totalorder %v452, 120
        %560 = vrot.lane.b32.xlu0 %v542, 120
        %v561 = vpop.permute.xlu0 %560
        %562 = vrot.lane.b32.xlu0 %v547, 120
        %v563 = vpop.permute.xlu0 %562
        %v564 = vsel %vm559, %v561, 0.0
        %v565 = vsel %vm559, %v563, 0.0
        %v566 = vlaneseq
        %v567 = vshrl.u32 %v566, 7
        %v568 = vsub.s32 0, %v567
        %v569 = vrot.slane %v550, %v568
        %v570 = vmul.f32 %v557, %v569
        %v571 = vmul.f32 %v558, %v569
        %v572 = vlaneseq
        %v573 = vshrl.u32 %v572, 7
        %v574 = vsub.s32 1, %v573
        %v575 = vrot.slane %v550, %v574
        %v576 = vmul.f32 %v542, %v575
        %v577 = vmul.f32 %v547, %v575
        %v578 = vadd.f32 %v570, %v576
        %v579 = vadd.f32 %v571, %v577
        %v580 = vlaneseq
        %v581 = vshrl.u32 %v580, 7
        %v582 = vsub.s32 2, %v581
        %v583 = vrot.slane %v550, %v582
        %v584 = vmul.f32 %v564, %v583
        %v585 = vmul.f32 %v565, %v583
        %v586 = vadd.f32 %v578, %v584
        %v587 = vadd.f32 %v579, %v585
        %v588 = vlaneseq
        %v589 = vshrl.u32 %v588, 7
        %v590 = vsub.s32 3, %v589
        %v591 = vrot.slane %v550, %v590
        %v592 = vmul.f32 %v557, %v591
        %v593 = vmul.f32 %v558, %v591
        %v594 = vlaneseq
        %v595 = vshrl.u32 %v594, 7
        %v596 = vsub.s32 4, %v595
        %v597 = vrot.slane %v550, %v596
        %v598 = vmul.f32 %v542, %v597
        %v599 = vmul.f32 %v547, %v597
        %v600 = vadd.f32 %v592, %v598
        %v601 = vadd.f32 %v593, %v599
        %v602 = vlaneseq
        %v603 = vshrl.u32 %v602, 7
        %v604 = vsub.s32 5, %v603
        %v605 = vrot.slane %v550, %v604
        %v606 = vmul.f32 %v564, %v605
        %v607 = vmul.f32 %v565, %v605
        %v608 = vadd.f32 %v600, %v606
        %v609 = vadd.f32 %v601, %v607
        %v610 = vlaneseq
        %v611 = vshrl.u32 %v610, 7
        %v612 = vsub.s32 6, %v611
        %v613 = vrot.slane %v550, %v612
        %v614 = vmul.f32 %v557, %v613
        %v615 = vmul.f32 %v558, %v613
        %v616 = vlaneseq
        %v617 = vshrl.u32 %v616, 7
        %v618 = vsub.s32 7, %v617
        %v619 = vrot.slane %v550, %v618
        %v620 = vmul.f32 %v542, %v619
        %v621 = vmul.f32 %v547, %v619
        %v622 = vadd.f32 %v614, %v620
        %v623 = vadd.f32 %v615, %v621
        %v624 = vlaneseq
        %v625 = vshrl.u32 %v624, 7
        %v626 = vsub.s32 0, %v625
        %v627 = vrot.slane %v551, %v626
        %v628 = vmul.f32 %v564, %v627
        %v629 = vmul.f32 %v565, %v627
        %v630 = vadd.f32 %v622, %v628
        %v631 = vadd.f32 %v623, %v629
        %vm632 = vcmp.ge.s32.totalorder %v454, 1
        %vm633 = vcmp.ge.s32.totalorder %v455, 1
        %v634 = vrot.slane %v586, 7
        %v635 = vrot.slane %v587, 7
        %vm636 = vcmp.lt.s32.totalorder %v454, 1
        %v637 = vsel %vm636, %v634, %v635
        %v638 = vsel %vm636, %v635, %v634
        %v639 = vsel %vm632, %v638, 0.0
        %v640 = vsel %vm633, %v637, 0.0
        %v641 = vadd.f32 %v608, %v639
        %v642 = vadd.f32 %v609, %v640
        %vm643 = vcmp.lt.s32.totalorder %v454, 15
        %vm644 = vcmp.lt.s32.totalorder %v455, 15
        %v645 = vrot.slane %v630, 1
        %v646 = vrot.slane %v631, 1
        %vm647 = vcmp.lt.s32.totalorder %v454, 7
        %v648 = vsel %vm647, %v645, %v646
        %v649 = vsel %vm647, %v646, %v645
        %v650 = vsel %vm643, %v648, 0.0
        %v651 = vsel %vm644, %v649, 0.0
        %v652 = vadd.f32 %v641, %v650
        %v653 = vadd.f32 %v642, %v651
        %v654 = vld [vmem:[#allocation8] sm:$0xff]
        %v655 = vld [vmem:[#allocation8 + $0x8] sm:$0xff]
        %v656 = vadd.f32 %v652, %v654
        %v657 = vadd.f32 %v653, %v655
        %v658 = vmax.f32 %v656, 0.0
        %v659 = vmax.f32 %v657, 0.0
        %v660 = vld [vmem:[%s4] sm:$0xff]
        %v661 = vld [vmem:[%s4 + $0x8] sm:$0xff]
        %v662 = vld [vmem:[%s4 + $0x10] sm:$0xff]
        %v663 = vld [vmem:[%s4 + $0x18] sm:$0xff]
        %v664 = vld [vmem:[%s4 + $0x20] sm:$0xff]
        %v665 = vld [vmem:[%s4 + $0x28] sm:$0xff]
        %v666 = vld [vmem:[%s4 + $0x30] sm:$0xff]
        %v667 = vld [vmem:[%s4 + $0x38] sm:$0xff]
        %v668 = vld [vmem:[%s4 + $0x40] sm:$0xff]
        %v669 = vld [vmem:[%s4 + $0x48] sm:$0xff]
        %v670 = vld [vmem:[%s4 + $0x50] sm:$0xff]
        %v671 = vld [vmem:[%s4 + $0x58] sm:$0xff]
        %v672 = vld [vmem:[%s4 + $0x60] sm:$0xff]
        %v673 = vld [vmem:[%s4 + $0x68] sm:$0xff]
        %v674 = vld [vmem:[%s4 + $0x70] sm:$0xff]
        %v675 = vld [vmem:[%s4 + $0x78] sm:$0xff]
        %676 = vmatprep.subr.mxu0 0.0
        %677 = vmatpush1.msra.mxu0 %v675
        %678 = vmatprep.subr.mxu0 0.0
        %679 = vmatpush1.msra.mxu0 %v674
        %680 = vmatprep.subr.mxu0 0.0
        %681 = vmatpush1.msra.mxu0 %v673
        %682 = vmatprep.subr.mxu0 0.0
        %683 = vmatpush1.msra.mxu0 %v672
        %684 = vmatprep.subr.mxu0 0.0
        %685 = vmatpush1.msra.mxu0 %v671
        %686 = vmatprep.subr.mxu0 0.0
        %687 = vmatpush1.msra.mxu0 %v670
        %688 = vmatprep.subr.mxu0 0.0
        %689 = vmatpush1.msra.mxu0 %v669
        %690 = vmatprep.subr.mxu0 0.0
        %691 = vmatpush1.msra.mxu0 %v668
        %692 = vmatprep.subr.mxu0 0.0
        %693 = vmatpush1.msra.mxu0 %v667
        %694 = vmatprep.subr.mxu0 0.0
        %695 = vmatpush1.msra.mxu0 %v666
        %696 = vmatprep.subr.mxu0 0.0
        %697 = vmatpush1.msra.mxu0 %v665
        %698 = vmatprep.subr.mxu0 0.0
        %699 = vmatpush1.msra.mxu0 %v664
        %700 = vmatprep.subr.mxu0 0.0
        %701 = vmatpush1.msra.mxu0 %v663
        %702 = vmatprep.subr.mxu0 0.0
        %703 = vmatpush1.msra.mxu0 %v662
        %704 = vmatprep.subr.mxu0 0.0
        %705 = vmatpush1.msra.mxu0 %v661
        %706 = vmatprep.subr.mxu0 0.0
        %707 = vmatpush1.msra.mxu0 %v660
        %708 = vmatprep.subr.mxu0 0.0
        %709 = vmatpush2.msra.mxu0 0.0
        %710 = vmatprep.subr.mxu0 0.0
        %711 = vmatpush2.msra.mxu0 0.0
        %712 = vmatprep.subr.mxu0 0.0
        %713 = vmatpush2.msra.mxu0 0.0
        %714 = vmatprep.subr.mxu0 0.0
        %715 = vmatpush2.msra.mxu0 0.0
        %716 = vmatprep.subr.mxu0 0.0
        %717 = vmatpush2.msra.mxu0 0.0
        %718 = vmatprep.subr.mxu0 0.0
        %719 = vmatpush2.msra.mxu0 0.0
        %720 = vmatprep.subr.mxu0 0.0
        %721 = vmatpush2.msra.mxu0 0.0
        %722 = vmatprep.subr.mxu0 0.0
        %723 = vmatpush2.msra.mxu0 0.0
        %724 = vmatprep.subr.mxu0 0.0
        %725 = vmatpush2.msra.mxu0 0.0
        %726 = vmatprep.subr.mxu0 0.0
        %727 = vmatpush2.msra.mxu0 0.0
        %728 = vmatprep.subr.mxu0 0.0
        %729 = vmatpush2.msra.mxu0 0.0
        %730 = vmatprep.subr.mxu0 0.0
        %731 = vmatpush2.msra.mxu0 0.0
        %732 = vmatprep.subr.mxu0 0.0
        %733 = vmatpush2.msra.mxu0 0.0
        %734 = vmatprep.subr.mxu0 0.0
        %735 = vmatpush2.msra.mxu0 0.0
        %736 = vmatprep.subr.mxu0 0.0
        %737 = vmatpush2.msra.mxu0 0.0
        %738 = vmatprep.subr.mxu0 0.0
        %739 = vmatpush2.msra.mxu0 0.0
        %740 = vmatprep.mubr.f32.mxu0 0.0
        %741 = vmatmul.mubr.f32.gmra.mxu0 %v658
        %v742 = vpop.f32.mrf.mxu0
        %v743 = vadd.f32 0.0, %v742
        %v744 = vpop.f32.mrf.mxu0
        %745 = vmatprep.mubr.f32.mxu0 0.0
        %746 = vmatmul.mubr.f32.gmra.mxu0 %v659
        %v747 = vpop.f32.mrf.mxu0
        %v748 = vadd.f32 0.0, %v747
        %v749 = vpop.f32.mrf.mxu0
        %750 = vdwg.mxu0
        %v751 = vld [vmem:[#allocation9] sm:$0xff]
        %v752 = vld [vmem:[#allocation9 + $0x8] sm:$0x1]
        %753 = vrot.lane.b32.xlu0 %v743, 8
        %v754 = vpop.permute.xlu0 %753
        %755 = vrot.lane.b32.xlu0 %v748, 8
        %v756 = vpop.permute.xlu0 %755
        %v757 = vsel %vm552, %v754, 0.0
        %v758 = vsel %vm552, %v756, 0.0
        %759 = vrot.lane.b32.xlu0 %v743, 120
        %v760 = vpop.permute.xlu0 %759
        %761 = vrot.lane.b32.xlu0 %v748, 120
        %v762 = vpop.permute.xlu0 %761
        %v763 = vsel %vm559, %v760, 0.0
        %v764 = vsel %vm559, %v762, 0.0
        %v765 = vlaneseq
        %v766 = vshrl.u32 %v765, 7
        %v767 = vsub.s32 0, %v766
        %v768 = vrot.slane %v751, %v767
        %v769 = vmul.f32 %v757, %v768
        %v770 = vmul.f32 %v758, %v768
        %v771 = vlaneseq
        %v772 = vshrl.u32 %v771, 7
        %v773 = vsub.s32 1, %v772
        %v774 = vrot.slane %v751, %v773
        %v775 = vmul.f32 %v743, %v774
        %v776 = vmul.f32 %v748, %v774
        %v777 = vadd.f32 %v769, %v775
        %v778 = vadd.f32 %v770, %v776
        %v779 = vlaneseq
        %v780 = vshrl.u32 %v779, 7
        %v781 = vsub.s32 2, %v780
        %v782 = vrot.slane %v751, %v781
        %v783 = vmul.f32 %v763, %v782
        %v784 = vmul.f32 %v764, %v782
        %v785 = vadd.f32 %v777, %v783
        %v786 = vadd.f32 %v778, %v784
        %v787 = vlaneseq
        %v788 = vshrl.u32 %v787, 7
        %v789 = vsub.s32 3, %v788
        %v790 = vrot.slane %v751, %v789
        %v791 = vmul.f32 %v757, %v790
        %v792 = vmul.f32 %v758, %v790
        %v793 = vlaneseq
        %v794 = vshrl.u32 %v793, 7
        %v795 = vsub.s32 4, %v794
        %v796 = vrot.slane %v751, %v795
        %v797 = vmul.f32 %v743, %v796
        %v798 = vmul.f32 %v748, %v796
        %v799 = vadd.f32 %v791, %v797
        %v800 = vadd.f32 %v792, %v798
        %v801 = vlaneseq
        %v802 = vshrl.u32 %v801, 7
        %v803 = vsub.s32 5, %v802
        %v804 = vrot.slane %v751, %v803
        %v805 = vmul.f32 %v763, %v804
        %v806 = vmul.f32 %v764, %v804
        %v807 = vadd.f32 %v799, %v805
        %v808 = vadd.f32 %v800, %v806
        %v809 = vlaneseq
        %v810 = vshrl.u32 %v809, 7
        %v811 = vsub.s32 6, %v810
        %v812 = vrot.slane %v751, %v811
        %v813 = vmul.f32 %v757, %v812
        %v814 = vmul.f32 %v758, %v812
        %v815 = vlaneseq
        %v816 = vshrl.u32 %v815, 7
        %v817 = vsub.s32 7, %v816
        %v818 = vrot.slane %v751, %v817
        %v819 = vmul.f32 %v743, %v818
        %v820 = vmul.f32 %v748, %v818
        %v821 = vadd.f32 %v813, %v819
        %v822 = vadd.f32 %v814, %v820
        %v823 = vlaneseq
        %v824 = vshrl.u32 %v823, 7
        %v825 = vsub.s32 0, %v824
        %v826 = vrot.slane %v752, %v825
        %v827 = vmul.f32 %v763, %v826
        %v828 = vmul.f32 %v764, %v826
        %v829 = vadd.f32 %v821, %v827
        %v830 = vadd.f32 %v822, %v828
        %v831 = vrot.slane %v785, 7
        %v832 = vrot.slane %v786, 7
        %v833 = vsel %vm636, %v831, %v832
        %v834 = vsel %vm636, %v832, %v831
        %v835 = vsel %vm632, %v834, 0.0
        %v836 = vsel %vm633, %v833, 0.0
        %v837 = vadd.f32 %v807, %v835
        %v838 = vadd.f32 %v808, %v836
        %v839 = vrot.slane %v829, 1
        %v840 = vrot.slane %v830, 1
        %v841 = vsel %vm647, %v839, %v840
        %v842 = vsel %vm647, %v840, %v839
        %v843 = vsel %vm643, %v841, 0.0
        %v844 = vsel %vm644, %v842, 0.0
        %v845 = vadd.f32 %v837, %v843
        %v846 = vadd.f32 %v838, %v844
        %v847 = vld [vmem:[#allocation11] sm:$0xff]
        %v848 = vld [vmem:[#allocation11 + $0x8] sm:$0xff]
        %v849 = vadd.f32 %v845, %v847
        %v850 = vadd.f32 %v846, %v848
        %851 = vrot.lane.b32.xlu0 %v849, 8
        %v852 = vpop.permute.xlu0 %851
        %853 = vrot.lane.b32.xlu0 %v850, 8
        %v854 = vpop.permute.xlu0 %853
        %v855 = vsel %vm552, %v852, -inf
        %v856 = vsel %vm552, %v854, -inf
        %857 = vrot.lane.b32.xlu0 %v849, 120
        %v858 = vpop.permute.xlu0 %857
        %859 = vrot.lane.b32.xlu0 %v850, 120
        %v860 = vpop.permute.xlu0 %859
        %v861 = vsel %vm559, %v858, -inf
        %v862 = vsel %vm559, %v860, -inf
        %v863 = vmax.f32 %v855, %v849
        %v864 = vmax.f32 %v856, %v850
        %v865 = vmax.f32 %v863, %v861
        %v866 = vmax.f32 %v864, %v862
        %v867 = vrot.slane %v865, 7
        %v868 = vrot.slane %v866, 7
        %v869 = vsel %vm636, %v867, %v868
        %v870 = vsel %vm636, %v868, %v867
        %v871 = vsel %vm632, %v870, -inf
        %v872 = vsel %vm633, %v869, -inf
        %v873 = vrot.slane %v865, 1
        %v874 = vrot.slane %v866, 1
        %v875 = vsel %vm647, %v873, %v874
        %v876 = vsel %vm647, %v874, %v873
        %v877 = vsel %vm643, %v875, -inf
        %v878 = vsel %vm644, %v876, -inf
        %v879 = vmax.f32 %v871, %v865
        %v880 = vmax.f32 %v872, %v866
        %v881 = vmax.f32 %v879, %v877
        %v882 = vmax.f32 %v880, %v878
        %883 = vst [vmem:[#allocation2] sm:$0xff] %v881
        %884 = vst [vmem:[#allocation2 + $0x8] sm:$0xff] %v882
        %v885 = vld [vmem:[#allocation2] ss:$2 sm:$0xff]
        %v886 = vld [vmem:[%s9] sm:$0xff]
        %v887 = vld [vmem:[%s9 + $0x8] sm:$0xff]
        %v888 = vld [vmem:[%s9 + $0x10] sm:$0xff]
        %v889 = vld [vmem:[%s9 + $0x18] sm:$0xff]
        %v890 = vld [vmem:[%s9 + $0x20] sm:$0xff]
        %v891 = vld [vmem:[%s9 + $0x28] sm:$0xff]
        %v892 = vld [vmem:[%s9 + $0x30] sm:$0xff]
        %v893 = vld [vmem:[%s9 + $0x38] sm:$0xff]
        %v894 = vld [vmem:[%s9 + $0x40] sm:$0xff]
        %v895 = vld [vmem:[%s9 + $0x48] sm:$0xff]
        %v896 = vld [vmem:[%s9 + $0x50] sm:$0xff]
        %v897 = vld [vmem:[%s9 + $0x58] sm:$0xff]
        %v898 = vld [vmem:[%s9 + $0x60] sm:$0xff]
        %v899 = vld [vmem:[%s9 + $0x68] sm:$0xff]
        %v900 = vld [vmem:[%s9 + $0x70] sm:$0xff]
        %v901 = vld [vmem:[%s9 + $0x78] sm:$0xff]
        %v902 = vld [vmem:[%s394] ss:$2 sm:$0xff]
        %v903 = vld [vmem:[#allocation12] sm:$0xff]
        %v904 = vld [vmem:[#allocation12 + $0x8] sm:$0xff]
        %v905 = vld [vmem:[#allocation12 + $0x10] sm:$0xff]
        %v906 = vld [vmem:[#allocation12 + $0x18] sm:$0xff]
        %v907 = vld [vmem:[#allocation12 + $0x20] sm:$0xff]
        %v908 = vld [vmem:[#allocation12 + $0x28] sm:$0xff]
        %v909 = vld [vmem:[#allocation12 + $0x30] sm:$0xff]
        %v910 = vld [vmem:[#allocation12 + $0x38] sm:$0xff]
        %v911 = vld [vmem:[%s8] sm:$0x1]
        %v913 = vlaneseq
        %v914 = vshrl.u32 %v913, 7
        %v915 = vsub.s32 0, %v914
        %v916 = vrot.slane %v911, %v915
        %v919 = vsel %vm468, %v902, 0
        %921 = vmatprep.subr.mxu0 0.0
        %922 = vmatpush1.msra.mxu0 0.0
        %923 = vmatprep.subr.mxu0 0.0
        %924 = vmatpush1.msra.mxu0 0.0
        %925 = vmatprep.subr.mxu0 0.0
        %926 = vmatpush1.msra.mxu0 0.0
        %927 = vmatprep.subr.mxu0 0.0
        %928 = vmatpush1.msra.mxu0 0.0
        %929 = vmatprep.subr.mxu0 0.0
        %930 = vmatpush1.msra.mxu0 0.0
        %931 = vmatprep.subr.mxu0 0.0
        %932 = vmatpush1.msra.mxu0 0.0
        %933 = vmatprep.subr.mxu0 0.0
        %934 = vmatpush1.msra.mxu0 0.0
        %935 = vmatprep.subr.mxu0 0.0
        %936 = vmatpush1.msra.mxu0 0.0
        %937 = vmatprep.subr.mxu0 0.0
        %938 = vmatpush1.msra.mxu0 %v910
        %939 = vmatprep.subr.mxu0 0.0
        %940 = vmatpush1.msra.mxu0 %v909
        %941 = vmatprep.subr.mxu0 0.0
        %942 = vmatpush1.msra.mxu0 %v908
        %943 = vmatprep.subr.mxu0 0.0
        %944 = vmatpush1.msra.mxu0 %v907
        %945 = vmatprep.subr.mxu0 0.0
        %946 = vmatpush1.msra.mxu0 %v906
        %947 = vmatprep.subr.mxu0 0.0
        %948 = vmatpush1.msra.mxu0 %v905
        %949 = vmatprep.subr.mxu0 0.0
        %950 = vmatpush1.msra.mxu0 %v904
        %951 = vmatprep.subr.mxu0 0.0
        %952 = vmatpush1.msra.mxu0 %v903
        %953 = vmatprep.subr.mxu0 0.0
        %954 = vmatpush2.msra.mxu0 0.0
        %955 = vmatprep.subr.mxu0 0.0
        %956 = vmatpush2.msra.mxu0 0.0
        %957 = vmatprep.subr.mxu0 0.0
        %958 = vmatpush2.msra.mxu0 0.0
        %959 = vmatprep.subr.mxu0 0.0
        %960 = vmatpush2.msra.mxu0 0.0
        %961 = vmatprep.subr.mxu0 0.0
        %962 = vmatpush2.msra.mxu0 0.0
        %963 = vmatprep.subr.mxu0 0.0
        %964 = vmatpush2.msra.mxu0 0.0
        %965 = vmatprep.subr.mxu0 0.0
        %966 = vmatpush2.msra.mxu0 0.0
        %967 = vmatprep.subr.mxu0 0.0
        %968 = vmatpush2.msra.mxu0 0.0
        %969 = vmatprep.subr.mxu0 0.0
        %970 = vmatpush2.msra.mxu0 0.0
        %971 = vmatprep.subr.mxu0 0.0
        %972 = vmatpush2.msra.mxu0 0.0
        %973 = vmatprep.subr.mxu0 0.0
        %974 = vmatpush2.msra.mxu0 0.0
        %975 = vmatprep.subr.mxu0 0.0
        %976 = vmatpush2.msra.mxu0 0.0
        %977 = vmatprep.subr.mxu0 0.0
        %978 = vmatpush2.msra.mxu0 0.0
        %979 = vmatprep.subr.mxu0 0.0
        %980 = vmatpush2.msra.mxu0 0.0
        %981 = vmatprep.subr.mxu0 0.0
        %982 = vmatpush2.msra.mxu0 0.0
        %983 = vmatprep.subr.mxu0 0.0
        %984 = vmatpush2.msra.mxu0 0.0
        %985 = vmatprep.mubr.f32.mxu0 0.0
        %986 = vmatmul.mubr.f32.gmra.mxu0 %v919
        %v987 = vpop.f32.mrf.mxu0
        %v988 = vadd.f32 %v916, %v987
        %v989 = vpop.f32.mrf.mxu0
        %990 = vdwg.mxu0
        %991 = vmatprep.subr.mxu0 0.0
        %992 = vmatpush1.msra.mxu0 %v901
        %993 = vmatprep.subr.mxu0 0.0
        %994 = vmatpush1.msra.mxu0 %v900
        %995 = vmatprep.subr.mxu0 0.0
        %996 = vmatpush1.msra.mxu0 %v899
        %997 = vmatprep.subr.mxu0 0.0
        %998 = vmatpush1.msra.mxu0 %v898
        %999 = vmatprep.subr.mxu0 0.0
        %1000 = vmatpush1.msra.mxu0 %v897
        %1001 = vmatprep.subr.mxu0 0.0
        %1002 = vmatpush1.msra.mxu0 %v896
        %1003 = vmatprep.subr.mxu0 0.0
        %1004 = vmatpush1.msra.mxu0 %v895
        %1005 = vmatprep.subr.mxu0 0.0
        %1006 = vmatpush1.msra.mxu0 %v894
        %1007 = vmatprep.subr.mxu0 0.0
        %1008 = vmatpush1.msra.mxu0 %v893
        %1009 = vmatprep.subr.mxu0 0.0
        %1010 = vmatpush1.msra.mxu0 %v892
        %1011 = vmatprep.subr.mxu0 0.0
        %1012 = vmatpush1.msra.mxu0 %v891
        %1013 = vmatprep.subr.mxu0 0.0
        %1014 = vmatpush1.msra.mxu0 %v890
        %1015 = vmatprep.subr.mxu0 0.0
        %1016 = vmatpush1.msra.mxu0 %v889
        %1017 = vmatprep.subr.mxu0 0.0
        %1018 = vmatpush1.msra.mxu0 %v888
        %1019 = vmatprep.subr.mxu0 0.0
        %1020 = vmatpush1.msra.mxu0 %v887
        %1021 = vmatprep.subr.mxu0 0.0
        %1022 = vmatpush1.msra.mxu0 %v886
        %1023 = vmatprep.subr.mxu0 0.0
        %1024 = vmatpush2.msra.mxu0 0.0
        %1025 = vmatprep.subr.mxu0 0.0
        %1026 = vmatpush2.msra.mxu0 0.0
        %1027 = vmatprep.subr.mxu0 0.0
        %1028 = vmatpush2.msra.mxu0 0.0
        %1029 = vmatprep.subr.mxu0 0.0
        %1030 = vmatpush2.msra.mxu0 0.0
        %1031 = vmatprep.subr.mxu0 0.0
        %1032 = vmatpush2.msra.mxu0 0.0
        %1033 = vmatprep.subr.mxu0 0.0
        %1034 = vmatpush2.msra.mxu0 0.0
        %1035 = vmatprep.subr.mxu0 0.0
        %1036 = vmatpush2.msra.mxu0 0.0
        %1037 = vmatprep.subr.mxu0 0.0
        %1038 = vmatpush2.msra.mxu0 0.0
        %1039 = vmatprep.subr.mxu0 0.0
        %1040 = vmatpush2.msra.mxu0 0.0
        %1041 = vmatprep.subr.mxu0 0.0
        %1042 = vmatpush2.msra.mxu0 0.0
        %1043 = vmatprep.subr.mxu0 0.0
        %1044 = vmatpush2.msra.mxu0 0.0
        %1045 = vmatprep.subr.mxu0 0.0
        %1046 = vmatpush2.msra.mxu0 0.0
        %1047 = vmatprep.subr.mxu0 0.0
        %1048 = vmatpush2.msra.mxu0 0.0
        %1049 = vmatprep.subr.mxu0 0.0
        %1050 = vmatpush2.msra.mxu0 0.0
        %1051 = vmatprep.subr.mxu0 0.0
        %1052 = vmatpush2.msra.mxu0 0.0
        %1053 = vmatprep.subr.mxu0 0.0
        %1054 = vmatpush2.msra.mxu0 0.0
        %1055 = vmatprep.mubr.f32.mxu0 0.0
        %1056 = vmatmul.mubr.f32.gmra.mxu0 %v885
        %v1057 = vpop.f32.mrf.mxu0
        %v1058 = vadd.f32 %v988, %v1057
        %v1059 = vpop.f32.mrf.mxu0
        %1060 = vdwg.mxu0
        %1061 = vst.msk [vmem:[%s450] sm:$0xff] %vm468, %v1058
        %s1062 = sand.u32 %s253, 1
        %s1063 = scalar_lea.sflag [#allocation5], %s1062
        %s1064 = sand.u32 %s253, 1
        %s1065 = smul.addr %s1064, 8
        %s1066 = scalar_lea.vmem [#allocation14], %s1065
        // Predicated region
        $region85: #{tpu_custom_call.1} parent=59 // pred_check
          %p1067 = pneg %p263
        $region86: #{tpu_custom_call.1} parent=59 // pred_check_branch
          %1069 = sbr.rel (%p1067) target = $region88
        $region87: #{tpu_custom_call.1} parent=59 // pred_region
          %s1071 = ssub.s32 128, 128
          %1072 = vsyncadd %s1063, %s1071
          %s1073 = smul.addr %s30, 128
          %s1074 = scalar_lea.hbm %s10, %s1073
          %s1076 = sshll.u32 %s1066, 4
          %s1077 = int_to_ptr.vmem [resolvable:$true] %s1076
          %1079 = dma.vmem_to_hbm [thread:$0]  %s1077, 128, %s1074, %s1063
        $region88: #{tpu_custom_call.1} parent=59 // pred_fallthru
          _
      $region60: #{tpu_custom_call.1} parent=5 // pred_fallthru
        _
      %p1080 = scmp.le.s32.totalorder 2, %s25
      // Predicated region
      $region89: #{tpu_custom_call.1} parent=5 // pred_check
        %p1081 = pneg %p1080
      $region90: #{tpu_custom_call.1} parent=5 // pred_check_branch
        %1083 = sbr.rel (%p1081) target = $region92
      $region91: #{tpu_custom_call.1} parent=5 // pred_region
        %s1084 = ssub.s32 %s25, 2
        // Predicated region
        $region93: #{tpu_custom_call.1} parent=91 // pred_check
          %p1085 = pneg %p269
        $region94: #{tpu_custom_call.1} parent=91 // pred_check_branch
          %1087 = sbr.rel (%p1085) target = $region96
        $region95: #{tpu_custom_call.1} parent=91 // pred_region
          %s1088 = sand.u32 %s254, 1
          %s1089 = scalar_lea.sflag [#allocation5], %s1088
          %s1090 = sand.u32 %s254, 1
          %s1091 = smul.addr %s1090, 8
          %s1092 = scalar_lea.vmem [#allocation14], %s1091
          %1093 = dma.done %s1089, 128
        $region96: #{tpu_custom_call.1} parent=91 // pred_fallthru
          _
      $region92: #{tpu_custom_call.1} parent=5 // pred_fallthru
        _
    $region6: #{tpu_custom_call.1} parent=1 // loop_footer
      %s29 = sadd.s32 1, %s25
    $region7: #{tpu_custom_call.1} parent=1 // loop_footer_branch
      %24 = sbr.rel target = $region3
    $region8: #{tpu_custom_call.1} parent=1 // loop_exit
      _
    %1094 = vsyncpa [#allocation4], 1
    %s1095 = scalar_lea.sflag [#allocation4], 1
    %1096 = vsyncpa %s1095, 1
    %1097 = vsyncpa [#allocation7], 1
    %1098 = vsyncpa [#allocation10], 1
    %1099 = vsyncpa [#allocation13], 1
    %1100 = vsyncpa [#allocation5], 1
    %s1101 = scalar_lea.sflag [#allocation5], 1
    %1102 = vsyncpa %s1101, 1

</llo_original>
